<compile_context>
chip_gen: v6e
topology: v6e:2x2x1
jax: 0.10.0
libtpu: 0.0.40
codegen_flags: <defaults>
</compile_context>

<pallas_src>
import jax
import jax.numpy as jnp
from jax.experimental import pallas as pl
from jax.experimental.pallas import tpu as pltpu


def _round_up(x, m):
    return (x + m - 1) // m * m


def _vmem_capacity_bytes():
    try:
        return int(pltpu.get_tpu_info().vmem_capacity_bytes)
    except Exception:
        return 64 << 20  # conservative fallback (v7x per-TC VMEM)


# --------------------------------------------------------------------------
# Kernel body.  Grid = (batch tiles, decoder-column tiles).
#   x tile + w1..w3/b1..b3 are VMEM-resident across the column axis; the
#   bottleneck/decoder-hidden activation (tb, 512) is computed once per batch
#   tile and reused for every decoder column tile.
# --------------------------------------------------------------------------
def autoencoder_kernel(x_ref,
                       w1_ref, b1_ref,
                       w2_ref, b2_ref,
                       w3_ref, b3_ref,
                       w4_ref, b4_ref,
                       o_ref,
                       h_ref):
    @pl.when(pl.program_id(1) == 0)
    def _encoder():
        # cast in-kernel (avoids a separate host-side cast pass over x)
        xb = x_ref[...].astype(jnp.bfloat16)
        # encoder: Linear(num_movies, 512) + ReLU   (Dropout = identity, eval)
        h = jnp.dot(xb, w1_ref[...], preferred_element_type=jnp.float32)
        h = jnp.maximum(h + b1_ref[...], 0.0).astype(jnp.bfloat16)
        # encoder: Linear(512, 128) + ReLU
        h = jnp.dot(h, w2_ref[...], preferred_element_type=jnp.float32)
        h = jnp.maximum(h + b2_ref[...], 0.0).astype(jnp.bfloat16)
        # decoder: Linear(128, 512) + ReLU
        h = jnp.dot(h, w3_ref[...], preferred_element_type=jnp.float32)
        h_ref[...] = jnp.maximum(h + b3_ref[...], 0.0).astype(jnp.bfloat16)

    # decoder: Linear(512, num_movies) column tile, no activation
    o_ref[...] = (jnp.dot(h_ref[...], w4_ref[...],
                          preferred_element_type=jnp.float32)
                  + b4_ref[...]).astype(o_ref.dtype)


def prepare_params(params, num_movies, *, tile_n=2048):
    """Pad + cast the weights ONCE (not per forward call).

    Weights are stored as (in_features, out_features); biases as (1, out).
    Feature padding is zero, so padded columns/rows contribute nothing.
    """
    nm_lane = _round_up(num_movies, 128)
    tn = min(_round_up(tile_n, 128), nm_lane)         # decoder column tile
    nm_p = _round_up(num_movies, tn)                  # padded feature dim
    pad_f = nm_p - num_movies

    prepared = {
        "w1": jnp.pad(params["w1"], ((0, pad_f), (0, 0))).astype(jnp.bfloat16),
        "b1": params["b1"].astype(jnp.float32),
        "w2": params["w2"].astype(jnp.bfloat16),
        "b2": params["b2"].astype(jnp.float32),
        "w3": params["w3"].astype(jnp.bfloat16),
        "b3": params["b3"].astype(jnp.float32),
        "w4": jnp.pad(params["w4"], ((0, 0), (0, pad_f))).astype(jnp.bfloat16),
        "b4": jnp.pad(params["b4"], ((0, 0), (0, pad_f))).astype(jnp.float32),
        "num_movies": num_movies,
        "nm_p": nm_p,
        "tn": tn,
    }
    return prepared


def autoencoder_forward(x, prepared, *, tile_b=256, out_dtype=jnp.bfloat16):
    """x: (B, num_movies) float array; prepared: output of prepare_params."""
    nm = prepared["num_movies"]
    nm_p = prepared["nm_p"]
    tn = prepared["tn"]
    w1, b1 = prepared["w1"], prepared["b1"]
    w2, b2 = prepared["w2"], prepared["b2"]
    w3, b3 = prepared["w3"], prepared["b3"]
    w4, b4 = prepared["w4"], prepared["b4"]

    B = x.shape[0]
    assert x.shape[1] == nm

    # ---- batch tile: multiple of 16 (bf16 sublane / MXU M alignment);
    #      keep >= 2 batch steps when possible so v7x megacore uses both TCs.
    tb = _round_up(min(tile_b, B), 16)
    if pl.cdiv(B, tb) == 1 and B > 16:
        tb = _round_up(pl.cdiv(B, 2), 16)
    B_p = _round_up(B, tb)

    x_p = x
    if (B_p, nm_p) != (B, nm):
        x_p = jnp.pad(x, ((0, B_p - B), (0, nm_p - nm)))

    n_b = B_p // tb
    n_n = nm_p // tn
    grid = (n_b, n_n)

    # ---- BlockSpecs -------------------------------------------------------
    def resident(arr):
        # full array, constant block index -> DMA'd once, stays VMEM-resident
        return pl.BlockSpec(arr.shape, lambda i, j: (0, 0))

    x_spec = pl.BlockSpec((tb, nm_p), lambda i, j: (i, 0))     # per batch tile
    w4_spec = pl.BlockSpec((512, tn), lambda i, j: (0, j))     # column-streamed
    b4_spec = pl.BlockSpec((1, tn), lambda i, j: (0, j))
    o_spec = pl.BlockSpec((tb, tn), lambda i, j: (i, j))

    in_specs = [x_spec,
                resident(w1), resident(b1),
                resident(w2), resident(b2),
                resident(w3), resident(b3),
                w4_spec, b4_spec]

    # ---- VMEM budget (conservative: 2 buffers for everything, including the
    #      constant-index-map resident weights, since Pallas may double-buffer
    #      them even though they are only DMA'd once).
    x_item = jnp.dtype(x_p.dtype).itemsize
    o_item = jnp.dtype(out_dtype).itemsize
    resident_bytes = 2 * (2 * (nm_p * 512 + 512 * 128 + 128 * 512)   # w1..w3 bf16
                          + 4 * (512 + 128 + 512))                   # b1..b3 f32
    streamed_bytes = 2 * (tb * nm_p * x_item                         # x tile
                          + 512 * tn * 2 + tn * 4                    # w4/b4 tile
                          + tb * tn * o_item)                        # out tile
    scratch_bytes = tb * 512 * 2                                     # hidden (bf16)
    body_bytes = tb * nm_p * 2 + 3 * tb * 512 * 4 + tb * tn * 4      # temporaries
    budget = resident_bytes + streamed_bytes + scratch_bytes + body_bytes
    vmem_limit = int(1.25 * budget) + (2 << 20)
    vmem_limit = max(32 << 20, vmem_limit)
    vmem_limit = min(vmem_limit, int(0.87 * _vmem_capacity_bytes()))

    out = pl.pallas_call(
        autoencoder_kernel,
        out_shape=jax.ShapeDtypeStruct((B_p, nm_p), out_dtype),
        grid=grid,
        in_specs=in_specs,
        out_specs=o_spec,
        scratch_shapes=[pltpu.VMEM((tb, 512), jnp.bfloat16)],
        compiler_params=pltpu.CompilerParams(
            dimension_semantics=("parallel", "arbitrary"),
            vmem_limit_bytes=vmem_limit,
        ),
    )(x_p, w1, b1, w2, b2, w3, b3, w4, b4)

    return out[:B, :nm]


def init_params(key, num_movies):
    """Deterministic init; weights stored as (in_features, out_features)."""
    dims = [(num_movies, 512), (512, 128), (128, 512), (512, num_movies)]
    params = {}
    keys = jax.random.split(key, 2 * len(dims))
    for i, (din, dout) in enumerate(dims):
        bound = 1.0 / jnp.sqrt(din)  # PyTorch nn.Linear default init range
        params[f"w{i+1}"] = jax.random.uniform(
            keys[2 * i], (din, dout), jnp.float32, -bound, bound)
        params[f"b{i+1}"] = jax.random.uniform(
            keys[2 * i + 1], (1, dout), jnp.float32, -bound, bound)
    return params


def reference_forward(x, p):
    h = jnp.maximum(x @ p["w1"] + p["b1"], 0.0)
    h = jnp.maximum(h @ p["w2"] + p["b2"], 0.0)
    h = jnp.maximum(h @ p["w3"] + p["b3"], 0.0)
    return h @ p["w4"] + p["b4"]


if __name__ == "__main__":
    # Small, deliberately non-aligned shapes to exercise padding, the batch
    # grid (2 steps) and the (degenerate, single-step) column grid.
    num_movies = 200
    batch = 100

    key = jax.random.PRNGKey(0)
    k_x, k_p = jax.random.split(key)
    x = jax.random.normal(k_x, (batch, num_movies), jnp.float32)
    params = init_params(k_p, num_movies)

    prepared = prepare_params(params, num_movies)        # pad + cast ONCE
    out = autoencoder_forward(x, prepared, tile_b=64)    # bf16 output
    out = jax.block_until_ready(out)

    ref = reference_forward(x, params)
    assert out.shape == (batch, num_movies)
    # bf16 inputs/weights/output with f32 accumulation -> loosened tolerance
    out_f32 = out.astype(jnp.float32)
    max_err = float(jnp.max(jnp.abs(out_f32 - ref)))
    assert jnp.allclose(out_f32, ref, atol=6e-2, rtol=6e-2), max_err

    print("KERNEL_OK")
</pallas_src>

<mosaic_0001>
module attributes {stable_mosaic.version = 11 : i64} {
  func.func @autoencoder_kernel(%arg0: i32, %arg1: i32, %arg2: memref<64x256xf32, #tpu.memory_space<vmem>>, %arg3: memref<256x512xbf16, #tpu.memory_space<vmem>>, %arg4: memref<1x512xf32, #tpu.memory_space<vmem>>, %arg5: memref<512x128xbf16, #tpu.memory_space<vmem>>, %arg6: memref<1x128xf32, #tpu.memory_space<vmem>>, %arg7: memref<128x512xbf16, #tpu.memory_space<vmem>>, %arg8: memref<1x512xf32, #tpu.memory_space<vmem>>, %arg9: memref<512x256xbf16, #tpu.memory_space<vmem>>, %arg10: memref<1x256xf32, #tpu.memory_space<vmem>>, %arg11: memref<64x256xbf16, #tpu.memory_space<vmem>>, %arg12: memref<64x512xbf16, #tpu.memory_space<vmem>>) attributes {dimension_semantics = [#tpu.dimension_semantics<parallel>, #tpu.dimension_semantics<arbitrary>], iteration_bounds = array<i64: 2, 1>, scalar_prefetch = 0 : i64, scratch_operands = 1 : i64, tpu.core_type = #tpu.core_type<tc>, window_params = [{transform_indices = @transform_0, window_bounds = array<i64: 64, 256>}, {pipeline_mode = #tpu.pipeline_mode<synchronous>, transform_indices = @transform_1, window_bounds = array<i64: 256, 512>}, {pipeline_mode = #tpu.pipeline_mode<synchronous>, transform_indices = @transform_2, window_bounds = array<i64: 1, 512>}, {pipeline_mode = #tpu.pipeline_mode<synchronous>, transform_indices = @transform_3, window_bounds = array<i64: 512, 128>}, {pipeline_mode = #tpu.pipeline_mode<synchronous>, transform_indices = @transform_4, window_bounds = array<i64: 1, 128>}, {pipeline_mode = #tpu.pipeline_mode<synchronous>, transform_indices = @transform_5, window_bounds = array<i64: 128, 512>}, {pipeline_mode = #tpu.pipeline_mode<synchronous>, transform_indices = @transform_6, window_bounds = array<i64: 1, 512>}, {transform_indices = @transform_7, window_bounds = array<i64: 512, 256>}, {transform_indices = @transform_8, window_bounds = array<i64: 1, 256>}, {transform_indices = @transform_9, window_bounds = array<i64: 64, 256>}]} {
    %c0_i32 = arith.constant 0 : i32
    %0 = arith.cmpi eq, %arg1, %c0_i32 : i32
    %1 = arith.extui %0 : i1 to i32
    %c0_i32_0 = arith.constant 0 : i32
    %2 = arith.cmpi ne, %1, %c0_i32_0 : i32
    scf.if %2 {
      %c0_8 = arith.constant 0 : index
      %c0_9 = arith.constant 0 : index
      %11 = vector.load %arg2[%c0_8, %c0_9] : memref<64x256xf32, #tpu.memory_space<vmem>>, vector<64x256xf32>
      %12 = arith.truncf %11 : vector<64x256xf32> to vector<64x256xbf16>
      %c0_10 = arith.constant 0 : index
      %c0_11 = arith.constant 0 : index
      %13 = vector.load %arg3[%c0_10, %c0_11] : memref<256x512xbf16, #tpu.memory_space<vmem>>, vector<256x512xbf16>
      %cst_12 = arith.constant dense<0.000000e+00> : vector<64x512xf32>
      %14 = tpu.matmul %12, %13, %cst_12 {dimension_numbers = #tpu.dot_dimension_numbers<[1], [0], [0], [1], [0, 0, 1, 1], [], []>} : vector<64x256xbf16>, vector<256x512xbf16>, vector<64x512xf32> -> vector<64x512xf32>
      %c0_13 = arith.constant 0 : index
      %c0_14 = arith.constant 0 : index
      %15 = vector.load %arg4[%c0_13, %c0_14] : memref<1x512xf32, #tpu.memory_space<vmem>>, vector<1x512xf32>
      %16 = vector.broadcast %15 : vector<1x512xf32> to vector<64x512xf32>
      %17 = arith.addf %14, %16 : vector<64x512xf32>
      %cst_15 = arith.constant 0.000000e+00 : f32
      %18 = vector.broadcast %cst_15 : f32 to vector<64x512xf32>
      %19 = arith.maximumf %17, %18 : vector<64x512xf32>
      %20 = arith.truncf %19 : vector<64x512xf32> to vector<64x512xbf16>
      %c0_16 = arith.constant 0 : index
      %c0_17 = arith.constant 0 : index
      %21 = vector.load %arg5[%c0_16, %c0_17] : memref<512x128xbf16, #tpu.memory_space<vmem>>, vector<512x128xbf16>
      %cst_18 = arith.constant dense<0.000000e+00> : vector<64x128xf32>
      %22 = tpu.matmul %20, %21, %cst_18 {dimension_numbers = #tpu.dot_dimension_numbers<[1], [0], [0], [1], [0, 0, 1, 1], [], []>} : vector<64x512xbf16>, vector<512x128xbf16>, vector<64x128xf32> -> vector<64x128xf32>
      %c0_19 = arith.constant 0 : index
      %c0_20 = arith.constant 0 : index
      %23 = vector.load %arg6[%c0_19, %c0_20] : memref<1x128xf32, #tpu.memory_space<vmem>>, vector<1x128xf32>
      %24 = vector.broadcast %23 : vector<1x128xf32> to vector<64x128xf32>
      %25 = arith.addf %22, %24 : vector<64x128xf32>
      %cst_21 = arith.constant 0.000000e+00 : f32
      %26 = vector.broadcast %cst_21 : f32 to vector<64x128xf32>
      %27 = arith.maximumf %25, %26 : vector<64x128xf32>
      %28 = arith.truncf %27 : vector<64x128xf32> to vector<64x128xbf16>
      %c0_22 = arith.constant 0 : index
      %c0_23 = arith.constant 0 : index
      %29 = vector.load %arg7[%c0_22, %c0_23] : memref<128x512xbf16, #tpu.memory_space<vmem>>, vector<128x512xbf16>
      %cst_24 = arith.constant dense<0.000000e+00> : vector<64x512xf32>
      %30 = tpu.matmul %28, %29, %cst_24 {dimension_numbers = #tpu.dot_dimension_numbers<[1], [0], [0], [1], [0, 0, 1, 1], [], []>} : vector<64x128xbf16>, vector<128x512xbf16>, vector<64x512xf32> -> vector<64x512xf32>
      %c0_25 = arith.constant 0 : index
      %c0_26 = arith.constant 0 : index
      %31 = vector.load %arg8[%c0_25, %c0_26] : memref<1x512xf32, #tpu.memory_space<vmem>>, vector<1x512xf32>
      %32 = vector.broadcast %31 : vector<1x512xf32> to vector<64x512xf32>
      %33 = arith.addf %30, %32 : vector<64x512xf32>
      %cst_27 = arith.constant 0.000000e+00 : f32
      %34 = vector.broadcast %cst_27 : f32 to vector<64x512xf32>
      %35 = arith.maximumf %33, %34 : vector<64x512xf32>
      %36 = arith.truncf %35 : vector<64x512xf32> to vector<64x512xbf16>
      %c0_28 = arith.constant 0 : index
      %c0_29 = arith.constant 0 : index
      %37 = vector.load %arg12[%c0_28, %c0_29] : memref<64x512xbf16, #tpu.memory_space<vmem>>, vector<64x512xbf16>
      tpu.vector_store %arg12[%c0_28, %c0_29], %36 {strides = array<i32>} : memref<64x512xbf16, #tpu.memory_space<vmem>>, vector<64x512xbf16>,
    } else {
    }
    %c0 = arith.constant 0 : index
    %c0_1 = arith.constant 0 : index
    %3 = vector.load %arg12[%c0, %c0_1] : memref<64x512xbf16, #tpu.memory_space<vmem>>, vector<64x512xbf16>
    %c0_2 = arith.constant 0 : index
    %c0_3 = arith.constant 0 : index
    %4 = vector.load %arg9[%c0_2, %c0_3] : memref<512x256xbf16, #tpu.memory_space<vmem>>, vector<512x256xbf16>
    %cst = arith.constant dense<0.000000e+00> : vector<64x256xf32>
    %5 = tpu.matmul %3, %4, %cst {dimension_numbers = #tpu.dot_dimension_numbers<[1], [0], [0], [1], [0, 0, 1, 1], [], []>} : vector<64x512xbf16>, vector<512x256xbf16>, vector<64x256xf32> -> vector<64x256xf32>
    %c0_4 = arith.constant 0 : index
    %c0_5 = arith.constant 0 : index
    %6 = vector.load %arg10[%c0_4, %c0_5] : memref<1x256xf32, #tpu.memory_space<vmem>>, vector<1x256xf32>
    %7 = vector.broadcast %6 : vector<1x256xf32> to vector<64x256xf32>
    %8 = arith.addf %5, %7 : vector<64x256xf32>
    %9 = arith.truncf %8 : vector<64x256xf32> to vector<64x256xbf16>
    %c0_6 = arith.constant 0 : index
    %c0_7 = arith.constant 0 : index
    %10 = vector.load %arg11[%c0_6, %c0_7] : memref<64x256xbf16, #tpu.memory_space<vmem>>, vector<64x256xbf16>
    tpu.vector_store %arg11[%c0_6, %c0_7], %9 {strides = array<i32>} : memref<64x256xbf16, #tpu.memory_space<vmem>>, vector<64x256xbf16>,
    return
  }
  func.func @transform_0(%arg0: i32, %arg1: i32) -> (i32, i32) {
    %c0_i32 = arith.constant 0 : i32
    %c0_i32_0 = arith.constant 0 : i32
    return %arg0, %c0_i32 : i32, i32
  }
  func.func @transform_1(%arg0: i32, %arg1: i32) -> (i32, i32) {
    %c0_i32 = arith.constant 0 : i32
    %c0_i32_0 = arith.constant 0 : i32
    %c0_i32_1 = arith.constant 0 : i32
    return %c0_i32, %c0_i32_0 : i32, i32
  }
  func.func @transform_2(%arg0: i32, %arg1: i32) -> (i32, i32) {
    %c0_i32 = arith.constant 0 : i32
    %c0_i32_0 = arith.constant 0 : i32
    %c0_i32_1 = arith.constant 0 : i32
    return %c0_i32, %c0_i32_0 : i32, i32
  }
  func.func @transform_3(%arg0: i32, %arg1: i32) -> (i32, i32) {
    %c0_i32 = arith.constant 0 : i32
    %c0_i32_0 = arith.constant 0 : i32
    %c0_i32_1 = arith.constant 0 : i32
    return %c0_i32, %c0_i32_0 : i32, i32
  }
  func.func @transform_4(%arg0: i32, %arg1: i32) -> (i32, i32) {
    %c0_i32 = arith.constant 0 : i32
    %c0_i32_0 = arith.constant 0 : i32
    %c0_i32_1 = arith.constant 0 : i32
    return %c0_i32, %c0_i32_0 : i32, i32
  }
  func.func @transform_5(%arg0: i32, %arg1: i32) -> (i32, i32) {
    %c0_i32 = arith.constant 0 : i32
    %c0_i32_0 = arith.constant 0 : i32
    %c0_i32_1 = arith.constant 0 : i32
    return %c0_i32, %c0_i32_0 : i32, i32
  }
  func.func @transform_6(%arg0: i32, %arg1: i32) -> (i32, i32) {
    %c0_i32 = arith.constant 0 : i32
    %c0_i32_0 = arith.constant 0 : i32
    %c0_i32_1 = arith.constant 0 : i32
    return %c0_i32, %c0_i32_0 : i32, i32
  }
  func.func @transform_7(%arg0: i32, %arg1: i32) -> (i32, i32) {
    %c0_i32 = arith.constant 0 : i32
    %c0_i32_0 = arith.constant 0 : i32
    return %c0_i32, %arg1 : i32, i32
  }
  func.func @transform_8(%arg0: i32, %arg1: i32) -> (i32, i32) {
    %c0_i32 = arith.constant 0 : i32
    %c0_i32_0 = arith.constant 0 : i32
    return %c0_i32, %arg1 : i32, i32
  }
  func.func @transform_9(%arg0: i32, %arg1: i32) -> (i32, i32) {
    %c0_i32 = arith.constant 0 : i32
    return %arg0, %arg1 : i32, i32
  }
}

</mosaic_0001>

<llo_original>
// kernel: tpu_custom_call.1
$region0: #{tpu_custom_call.1}
  #allocation0 [shape = 'u32[]', space=smem, size = 0x4, offset = 0x4, fixed_abs, tag = 'smem constant byte address 0x4 - core index']
  #allocation1 [shape = 'u32[144,128]{1,0:T(1,128)}', space=vmem, size = 0x12000, scoped, tag = 'internal scratch']
  #allocation2 [shape = 'bf16[64,512]{1,0:T(8,128)(2,1)}', space=vmem, size = 0x10000, scoped, tag = 'scratch operand']
  %s0 = inlined_call_operand.hbm [shape: f32[128,256], index: 0, kind: input, shape index: {}]
  %s1 = inlined_call_operand.hbm [shape: bf16[256,512], index: 1, kind: input, shape index: {}]
  %s2 = inlined_call_operand.hbm [shape: f32[1,512], index: 2, kind: input, shape index: {}]
  %s3 = inlined_call_operand.hbm [shape: bf16[512,128], index: 3, kind: input, shape index: {}]
  %s4 = inlined_call_operand.vmem [shape: f32[1,128], index: 4, kind: input, shape index: {}]
  %s5 = inlined_call_operand.hbm [shape: bf16[128,512], index: 5, kind: input, shape index: {}]
  %s6 = inlined_call_operand.vmem [shape: f32[1,512], index: 6, kind: input, shape index: {}]
  %s7 = inlined_call_operand.hbm [shape: bf16[512,256], index: 7, kind: input, shape index: {}]
  %s8 = inlined_call_operand.vmem [shape: f32[1,256], index: 8, kind: input, shape index: {}]
  %s9 = inlined_call_operand.hbm [shape: bf16[128,256], index: 9, kind: output, shape index: {}]
  %s10 = sld [smem:[#allocation0]]
  $region97: #{tpu_custom_call.1} parent=0
    _
  %s12 = ssub.s32 1, %s10
  %s13 = scalar_select 0, %s12, %s10
  $region1: #{tpu_custom_call.1} parent=0
    #allocation3 [shape = 'u8[131072]{0}', space=vmem, size = 0x20000, scoped, tag = 'input window, operand 0']
    #allocation4 [shape = 's32[2]{0}', space=sflag, size = 0x8, scoped, tag = 'scoped memory for tpu_custom_call.1']
    #allocation5 [shape = 's32[2]{0}', space=sflag, size = 0x8, scoped, tag = 'scoped memory for tpu_custom_call.1']
    #allocation6 [shape = 'u8[262144]{0}', space=vmem, size = 0x40000, scoped, tag = 'input window, operand 1, single buffered']
    #allocation7 [shape = 's32[1]{0}', space=sflag, size = 0x4, scoped, tag = 'scoped memory for tpu_custom_call.1']
    #allocation8 [shape = 'u8[2048]{0}', space=vmem, size = 0x800, scoped, tag = 'input window, operand 2, single buffered']
    #allocation9 [shape = 'u8[131072]{0}', space=vmem, size = 0x20000, scoped, tag = 'input window, operand 3, single buffered']
    #allocation10 [shape = 's32[1]{0}', space=sflag, size = 0x4, scoped, tag = 'scoped memory for tpu_custom_call.1']
    #allocation11 [shape = 'u8[131072]{0}', space=vmem, size = 0x20000, scoped, tag = 'input window, operand 5, single buffered']
    #allocation12 [shape = 'u8[262144]{0}', space=vmem, size = 0x40000, scoped, tag = 'input window, operand 7, single buffered']
    #allocation13 [shape = 's32[1]{0}', space=sflag, size = 0x4, scoped, tag = 'scoped memory for tpu_custom_call.1']
    #allocation14 [shape = 'u8[65536]{0}', space=vmem, size = 0x10000, scoped, tag = 'output window, operand 0']
    %14 = vsyncpa [#allocation4], 0
    %s15 = scalar_lea.sflag [#allocation4], 1
    %16 = vsyncpa %s15, 0
    %17 = vsyncpa [#allocation7], 0
    %18 = vsyncpa [#allocation10], 0
    %19 = vsyncpa [#allocation13], 0
    %20 = vsyncpa [#allocation5], 0
    %s21 = scalar_lea.sflag [#allocation5], 1
    %22 = vsyncpa %s21, 0
    loop: start=0, step=1, limit=4
    $region2: #{tpu_custom_call.1} parent=1 // loop_pre_header
      _
    $region3: #{tpu_custom_call.1} parent=1 // loop_header
      %s24 = sphi 0, %s28
      %p25 = scmp.ge.s32.totalorder %s24, 4
      %s31 = sphi 0, %s43
      %s32 = sphi 0, %s39
      %s33 = sphi 0, %s31
      %s34 = sphi 0, %s32
      %s35 = sphi 0, %s33
      %s36 = sphi 0, %s34
      %s46 = sphi 0, %s48
      %s49 = sphi 0, %s46
      %s50 = sphi 0, %s49
      %s66 = sphi 0, %s50
      %s70 = sphi 0, %s70
      %s72 = sphi 0, %s70
      %s73 = sphi 0, %s72
      %s87 = sphi 0, %s73
      %s91 = sphi 0, %s91
      %s93 = sphi 0, %s91
      %s94 = sphi 0, %s93
      %s108 = sphi 0, %s94
      %s112 = sphi 0, %s112
      %s114 = sphi 0, %s112
      %s115 = sphi 0, %s114
      %s129 = sphi 0, %s115
      %s133 = sphi 0, %s133
      %s135 = sphi 0, %s133
      %s136 = sphi 0, %s135
      %s150 = sphi 0, %s136
      %s154 = sphi 0, %s154
      %s156 = sphi 0, %s154
      %s157 = sphi 0, %s156
      %s171 = sphi 0, %s157
      %s175 = sphi 0, %s175
      %s177 = sphi 0, %s175
      %s178 = sphi 0, %s177
      %s192 = sphi 0, %s178
      %s198 = sphi 0, %s200
      %s201 = sphi 0, %s198
      %s202 = sphi 0, %s201
      %s218 = sphi 0, %s202
      %s224 = sphi 0, %s226
      %s227 = sphi 0, %s224
      %s228 = sphi 0, %s227
      %s244 = sphi 0, %s228
      %s252 = sphi 0, %s254
      %s255 = sphi 0, %s252
      %s256 = sphi 0, %s255
      %s272 = sphi 0, %s256
    $region4: #{tpu_custom_call.1} parent=1 // loop_header_branch
      %27 = sbr.rel (%p25) target = $region8
    $region5: #{tpu_custom_call.1} parent=1 // loop_body
      %s29 = ssub.s32 %s24, 1
      %s30 = ssub.s32 %s24, 2
      %s37 = sadd.s32 1, %s32
      %p38 = scmp.ge.s32.totalorder %s37, 1
      %s39 = scalar_select %p38, 0, %s37
      %s40 = sadd.s32 1, %s31
      %s41 = scalar_select %p38, %s40, %s31
      %p42 = scmp.ge.s32.totalorder %s41, 2
      %s43 = scalar_select %p42, 0, %s41
      %s44 = ssub.s32 %s31, %s43
      %p45 = scmp.eq.s32.totalorder %s44, 0
      %s47 = sadd.s32 %s46, 1
      %s48 = scalar_select %p45, %s46, %s47
      %p51 = pneg %p45
      %p52 = scmp.eq.s32.totalorder %s24, 1
      %p53 = por %p51, %p52
      %p54 = scmp.ne.s32.totalorder %s46, %s49
      %p55 = scmp.eq.s32.totalorder %s24, 0
      %p56 = por %p54, %p55
      %p57 = scmp.ne.s32.totalorder %s46, %s49
      %p58 = scmp.eq.s32.totalorder %s29, 1
      %p59 = por %p57, %p58
      %p60 = scmp.ne.s32.totalorder %s49, %s50
      %p61 = scmp.eq.s32.totalorder %s29, 0
      %p62 = por %p60, %p61
      %p63 = scmp.ne.s32.totalorder %s49, %s50
      %p64 = scmp.eq.s32.totalorder %s30, 1
      %p65 = por %p63, %p64
      %p67 = scmp.ne.s32.totalorder %s50, %s66
      %p68 = scmp.eq.s32.totalorder %s30, 0
      %p69 = por %p67, %p68
      %s71 = sadd.s32 %s70, 1
      %p74 = scmp.eq.s32.totalorder %s24, 1
      %p75 = scmp.ne.s32.totalorder %s70, %s72
      %p76 = scmp.eq.s32.totalorder %s24, 0
      %p77 = por %p75, %p76
      %p78 = scmp.ne.s32.totalorder %s70, %s72
      %p79 = scmp.eq.s32.totalorder %s29, 1
      %p80 = por %p78, %p79
      %p81 = scmp.ne.s32.totalorder %s72, %s73
      %p82 = scmp.eq.s32.totalorder %s29, 0
      %p83 = por %p81, %p82
      %p84 = scmp.ne.s32.totalorder %s72, %s73
      %p85 = scmp.eq.s32.totalorder %s30, 1
      %p86 = por %p84, %p85
      %p88 = scmp.ne.s32.totalorder %s73, %s87
      %p89 = scmp.eq.s32.totalorder %s30, 0
      %p90 = por %p88, %p89
      %s92 = sadd.s32 %s91, 1
      %p95 = scmp.eq.s32.totalorder %s24, 1
      %p96 = scmp.ne.s32.totalorder %s91, %s93
      %p97 = scmp.eq.s32.totalorder %s24, 0
      %p98 = por %p96, %p97
      %p99 = scmp.ne.s32.totalorder %s91, %s93
      %p100 = scmp.eq.s32.totalorder %s29, 1
      %p101 = por %p99, %p100
      %p102 = scmp.ne.s32.totalorder %s93, %s94
      %p103 = scmp.eq.s32.totalorder %s29, 0
      %p104 = por %p102, %p103
      %p105 = scmp.ne.s32.totalorder %s93, %s94
      %p106 = scmp.eq.s32.totalorder %s30, 1
      %p107 = por %p105, %p106
      %p109 = scmp.ne.s32.totalorder %s94, %s108
      %p110 = scmp.eq.s32.totalorder %s30, 0
      %p111 = por %p109, %p110
      %s113 = sadd.s32 %s112, 1
      %p116 = scmp.eq.s32.totalorder %s24, 1
      %p117 = scmp.ne.s32.totalorder %s112, %s114
      %p118 = scmp.eq.s32.totalorder %s24, 0
      %p119 = por %p117, %p118
      %p120 = scmp.ne.s32.totalorder %s112, %s114
      %p121 = scmp.eq.s32.totalorder %s29, 1
      %p122 = por %p120, %p121
      %p123 = scmp.ne.s32.totalorder %s114, %s115
      %p124 = scmp.eq.s32.totalorder %s29, 0
      %p125 = por %p123, %p124
      %p126 = scmp.ne.s32.totalorder %s114, %s115
      %p127 = scmp.eq.s32.totalorder %s30, 1
      %p128 = por %p126, %p127
      %p130 = scmp.ne.s32.totalorder %s115, %s129
      %p131 = scmp.eq.s32.totalorder %s30, 0
      %p132 = por %p130, %p131
      %s134 = sadd.s32 %s133, 1
      %p137 = scmp.eq.s32.totalorder %s24, 1
      %p138 = scmp.ne.s32.totalorder %s133, %s135
      %p139 = scmp.eq.s32.totalorder %s24, 0
      %p140 = por %p138, %p139
      %p141 = scmp.ne.s32.totalorder %s133, %s135
      %p142 = scmp.eq.s32.totalorder %s29, 1
      %p143 = por %p141, %p142
      %p144 = scmp.ne.s32.totalorder %s135, %s136
      %p145 = scmp.eq.s32.totalorder %s29, 0
      %p146 = por %p144, %p145
      %p147 = scmp.ne.s32.totalorder %s135, %s136
      %p148 = scmp.eq.s32.totalorder %s30, 1
      %p149 = por %p147, %p148
      %p151 = scmp.ne.s32.totalorder %s136, %s150
      %p152 = scmp.eq.s32.totalorder %s30, 0
      %p153 = por %p151, %p152
      %s155 = sadd.s32 %s154, 1
      %p158 = scmp.eq.s32.totalorder %s24, 1
      %p159 = scmp.ne.s32.totalorder %s154, %s156
      %p160 = scmp.eq.s32.totalorder %s24, 0
      %p161 = por %p159, %p160
      %p162 = scmp.ne.s32.totalorder %s154, %s156
      %p163 = scmp.eq.s32.totalorder %s29, 1
      %p164 = por %p162, %p163
      %p165 = scmp.ne.s32.totalorder %s156, %s157
      %p166 = scmp.eq.s32.totalorder %s29, 0
      %p167 = por %p165, %p166
      %p168 = scmp.ne.s32.totalorder %s156, %s157
      %p169 = scmp.eq.s32.totalorder %s30, 1
      %p170 = por %p168, %p169
      %p172 = scmp.ne.s32.totalorder %s157, %s171
      %p173 = scmp.eq.s32.totalorder %s30, 0
      %p174 = por %p172, %p173
      %s176 = sadd.s32 %s175, 1
      %p179 = scmp.eq.s32.totalorder %s24, 1
      %p180 = scmp.ne.s32.totalorder %s175, %s177
      %p181 = scmp.eq.s32.totalorder %s24, 0
      %p182 = por %p180, %p181
      %p183 = scmp.ne.s32.totalorder %s175, %s177
      %p184 = scmp.eq.s32.totalorder %s29, 1
      %p185 = por %p183, %p184
      %p186 = scmp.ne.s32.totalorder %s177, %s178
      %p187 = scmp.eq.s32.totalorder %s29, 0
      %p188 = por %p186, %p187
      %p189 = scmp.ne.s32.totalorder %s177, %s178
      %p190 = scmp.eq.s32.totalorder %s30, 1
      %p191 = por %p189, %p190
      %p193 = scmp.ne.s32.totalorder %s178, %s192
      %p194 = scmp.eq.s32.totalorder %s30, 0
      %p195 = por %p193, %p194
      %s196 = ssub.s32 %s32, %s39
      %p197 = scmp.eq.s32.totalorder %s196, 0
      %s199 = sadd.s32 %s198, 1
      %s200 = scalar_select %p197, %s198, %s199
      %p203 = pneg %p197
      %p204 = scmp.eq.s32.totalorder %s24, 1
      %p205 = por %p203, %p204
      %p206 = scmp.ne.s32.totalorder %s198, %s201
      %p207 = scmp.eq.s32.totalorder %s24, 0
      %p208 = por %p206, %p207
      %p209 = scmp.ne.s32.totalorder %s198, %s201
      %p210 = scmp.eq.s32.totalorder %s29, 1
      %p211 = por %p209, %p210
      %p212 = scmp.ne.s32.totalorder %s201, %s202
      %p213 = scmp.eq.s32.totalorder %s29, 0
      %p214 = por %p212, %p213
      %p215 = scmp.ne.s32.totalorder %s201, %s202
      %p216 = scmp.eq.s32.totalorder %s30, 1
      %p217 = por %p215, %p216
      %p219 = scmp.ne.s32.totalorder %s202, %s218
      %p220 = scmp.eq.s32.totalorder %s30, 0
      %p221 = por %p219, %p220
      %s222 = ssub.s32 %s32, %s39
      %p223 = scmp.eq.s32.totalorder %s222, 0
      %s225 = sadd.s32 %s224, 1
      %s226 = scalar_select %p223, %s224, %s225
      %p229 = pneg %p223
      %p230 = scmp.eq.s32.totalorder %s24, 1
      %p231 = por %p229, %p230
      %p232 = scmp.ne.s32.totalorder %s224, %s227
      %p233 = scmp.eq.s32.totalorder %s24, 0
      %p234 = por %p232, %p233
      %p235 = scmp.ne.s32.totalorder %s224, %s227
      %p236 = scmp.eq.s32.totalorder %s29, 1
      %p237 = por %p235, %p236
      %p238 = scmp.ne.s32.totalorder %s227, %s228
      %p239 = scmp.eq.s32.totalorder %s29, 0
      %p240 = por %p238, %p239
      %p241 = scmp.ne.s32.totalorder %s227, %s228
      %p242 = scmp.eq.s32.totalorder %s30, 1
      %p243 = por %p241, %p242
      %p245 = scmp.ne.s32.totalorder %s228, %s244
      %p246 = scmp.eq.s32.totalorder %s30, 0
      %p247 = por %p245, %p246
      %s248 = ssub.s32 %s31, %s43
      %s249 = ssub.s32 %s32, %s39
      %s250 = sor.u32 %s248, %s249
      %p251 = scmp.eq.s32.totalorder %s250, 0
      %s253 = sadd.s32 %s252, 1
      %s254 = scalar_select %p251, %s252, %s253
      %p257 = pneg %p251
      %p258 = scmp.eq.s32.totalorder %s24, 1
      %p259 = por %p257, %p258
      %p260 = scmp.ne.s32.totalorder %s252, %s255
      %p261 = scmp.eq.s32.totalorder %s24, 0
      %p262 = por %p260, %p261
      %p263 = scmp.ne.s32.totalorder %s252, %s255
      %p264 = scmp.eq.s32.totalorder %s29, 1
      %p265 = por %p263, %p264
      %p266 = scmp.ne.s32.totalorder %s255, %s256
      %p267 = scmp.eq.s32.totalorder %s29, 0
      %p268 = por %p266, %p267
      %p269 = scmp.ne.s32.totalorder %s255, %s256
      %p270 = scmp.eq.s32.totalorder %s30, 1
      %p271 = por %p269, %p270
      %p273 = scmp.ne.s32.totalorder %s256, %s272
      %p274 = scmp.eq.s32.totalorder %s30, 0
      %p275 = por %p273, %p274
      %p276 = scmp.le.s32.totalorder 1, %s24
      %p277 = scmp.lt.s32.totalorder %s24, 3
      %p278 = pnand %p276, %p277
      %p279 = pneg %p278
      // Predicated region
      $region9: #{tpu_custom_call.1} parent=5 // pred_check
        _
      $region10: #{tpu_custom_call.1} parent=5 // pred_check_branch
        %281 = sbr.rel (%p278) target = $region12
      $region11: #{tpu_custom_call.1} parent=5 // pred_region
        %s282 = ssub.s32 %s24, 1
        // Predicated region
        $region13: #{tpu_custom_call.1} parent=11 // pred_check
          %p283 = pneg %p83
        $region14: #{tpu_custom_call.1} parent=11 // pred_check_branch
          %285 = sbr.rel (%p283) target = $region16
        $region15: #{tpu_custom_call.1} parent=11 // pred_region
          %s287 = ssub.s32 8192, 8192
          %288 = vsyncadd [#allocation7], %s287
          %s289 = sshll.u32 [#allocation6], 4
          %s290 = int_to_ptr.vmem [resolvable:$true] %s289
          %295 = dma.hbm_to_vmem [thread:$0]  %s1, 8192, %s290, [#allocation7], 256, 256, 16
        $region16: #{tpu_custom_call.1} parent=11 // pred_fallthru
          _
        // Predicated region
        $region17: #{tpu_custom_call.1} parent=11 // pred_check
          %p296 = pneg %p104
        $region18: #{tpu_custom_call.1} parent=11 // pred_check_branch
          %298 = sbr.rel (%p296) target = $region20
        $region19: #{tpu_custom_call.1} parent=11 // pred_region
          %s300 = ssub.s32 64, 64
          %301 = vsyncadd [#allocation7], %s300
          %s303 = sshll.u32 [#allocation8], 4
          %s304 = int_to_ptr.vmem [resolvable:$true] %s303
          %306 = dma.hbm_to_vmem [thread:$0]  %s2, 64, %s304, [#allocation7]
        $region20: #{tpu_custom_call.1} parent=11 // pred_fallthru
          _
        // Predicated region
        $region21: #{tpu_custom_call.1} parent=11 // pred_check
          %p307 = pneg %p125
        $region22: #{tpu_custom_call.1} parent=11 // pred_check_branch
          %309 = sbr.rel (%p307) target = $region24
        $region23: #{tpu_custom_call.1} parent=11 // pred_region
          %s311 = ssub.s32 4096, 4096
          %312 = vsyncadd [#allocation10], %s311
          %s313 = sshll.u32 [#allocation9], 4
          %s314 = int_to_ptr.vmem [resolvable:$true] %s313
          %319 = dma.hbm_to_vmem [thread:$0]  %s3, 4096, %s314, [#allocation10], 64, 64, 4
        $region24: #{tpu_custom_call.1} parent=11 // pred_fallthru
          _
        // Predicated region
        $region25: #{tpu_custom_call.1} parent=11 // pred_check
          %p320 = pneg %p146
        $region26: #{tpu_custom_call.1} parent=11 // pred_check_branch
          %322 = sbr.rel (%p320) target = $region28
        $region27: #{tpu_custom_call.1} parent=11 // pred_region
          _
        $region28: #{tpu_custom_call.1} parent=11 // pred_fallthru
          _
        // Predicated region
        $region29: #{tpu_custom_call.1} parent=11 // pred_check
          %p323 = pneg %p167
        $region30: #{tpu_custom_call.1} parent=11 // pred_check_branch
          %325 = sbr.rel (%p323) target = $region32
        $region31: #{tpu_custom_call.1} parent=11 // pred_region
          %s327 = ssub.s32 4096, 4096
          %328 = vsyncadd [#allocation10], %s327
          %s329 = sshll.u32 [#allocation11], 4
          %s330 = int_to_ptr.vmem [resolvable:$true] %s329
          %335 = dma.hbm_to_vmem [thread:$0]  %s5, 4096, %s330, [#allocation10], 256, 256, 16
        $region32: #{tpu_custom_call.1} parent=11 // pred_fallthru
          _
        // Predicated region
        $region33: #{tpu_custom_call.1} parent=11 // pred_check
          %p336 = pneg %p188
        $region34: #{tpu_custom_call.1} parent=11 // pred_check_branch
          %338 = sbr.rel (%p336) target = $region36
        $region35: #{tpu_custom_call.1} parent=11 // pred_region
          _
        $region36: #{tpu_custom_call.1} parent=11 // pred_fallthru
          _
        // Predicated region
        $region37: #{tpu_custom_call.1} parent=11 // pred_check
          %p339 = pneg %p214
        $region38: #{tpu_custom_call.1} parent=11 // pred_check_branch
          %341 = sbr.rel (%p339) target = $region40
        $region39: #{tpu_custom_call.1} parent=11 // pred_region
          %s342 = smul.u32 2, %s34
          %s344 = ssub.s32 8192, 8192
          %345 = vsyncadd [#allocation13], %s344
          %s346 = smul.addr %s342, 64
          %s347 = scalar_lea.hbm %s7, %s346
          %s348 = sshll.u32 [#allocation12], 4
          %s349 = int_to_ptr.vmem [resolvable:$true] %s348
          %354 = dma.hbm_to_vmem [thread:$0]  %s347, 8192, %s349, [#allocation13], 128, 128, 8
        $region40: #{tpu_custom_call.1} parent=11 // pred_fallthru
          _
        // Predicated region
        $region41: #{tpu_custom_call.1} parent=11 // pred_check
          %p355 = pneg %p240
        $region42: #{tpu_custom_call.1} parent=11 // pred_check_branch
          %357 = sbr.rel (%p355) target = $region44
        $region43: #{tpu_custom_call.1} parent=11 // pred_region
          %s358 = smul.u32 2, %s34
          %p359 = scmp.lt.s32.totalorder %s358, 1
          %s360 = scalar_select %p359, %s358, 1
          %s361 = scalar_lea.vmem %s8, %s360
          %s362 = smul.u32 2, %s34
        $region44: #{tpu_custom_call.1} parent=11 // pred_fallthru
          _
      $region12: #{tpu_custom_call.1} parent=5 // pred_fallthru
        _
      %p363 = scmp.lt.s32.totalorder %s24, 2
      // Predicated region
      $region45: #{tpu_custom_call.1} parent=5 // pred_check
        %p364 = pneg %p363
      $region46: #{tpu_custom_call.1} parent=5 // pred_check_branch
        %366 = sbr.rel (%p364) target = $region48
      $region47: #{tpu_custom_call.1} parent=5 // pred_region
        // Predicated region
        $region49: #{tpu_custom_call.1} parent=47 // pred_check
          %p367 = pneg %p56
        $region50: #{tpu_custom_call.1} parent=47 // pred_check_branch
          %369 = sbr.rel (%p367) target = $region52
        $region51: #{tpu_custom_call.1} parent=47 // pred_region
          %s370 = sand.u32 %s46, 1
          %s371 = scalar_lea.sflag [#allocation4], %s370
          %s372 = sand.u32 %s46, 1
          %s373 = smul.addr %s372, 128
          %s374 = scalar_lea.vmem [#allocation3], %s373
          %s375 = smul.u32 8, %s31
          %s377 = ssub.s32 2048, 2048
          %378 = vsyncadd %s371, %s377
          %s379 = smul.addr %s375, 2
          %s380 = smul.addr %s379, 128
          %s381 = scalar_lea.hbm %s0, %s380
          %s382 = sshll.u32 %s374, 4
          %s383 = int_to_ptr.vmem [resolvable:$true] %s382
          %388 = dma.hbm_to_vmem [thread:$0]  %s381, 2048, %s383, %s371, 256, 256, 16
        $region52: #{tpu_custom_call.1} parent=47 // pred_fallthru
          _
      $region48: #{tpu_custom_call.1} parent=5 // pred_fallthru
        _
      %p389 = scmp.le.s32.totalorder 1, %s24
      %p390 = scmp.lt.s32.totalorder %s24, 3
      %p391 = pnand %p389, %p390
      %p392 = pneg %p391
      // Predicated region
      $region53: #{tpu_custom_call.1} parent=5 // pred_check
        _
      $region54: #{tpu_custom_call.1} parent=5 // pred_check_branch
        %394 = sbr.rel (%p391) target = $region56
      $region55: #{tpu_custom_call.1} parent=5 // pred_region
        %s395 = ssub.s32 %s24, 1
        %s396 = sand.u32 %s49, 1
        %s397 = scalar_lea.sflag [#allocation4], %s396
        %s398 = sand.u32 %s49, 1
        %s399 = smul.addr %s398, 128
        %s400 = scalar_lea.vmem [#allocation3], %s399
        // Predicated region
        $region57: #{tpu_custom_call.1} parent=55 // pred_check
          %p401 = pneg %p62
        $region58: #{tpu_custom_call.1} parent=55 // pred_check_branch
          %403 = sbr.rel (%p401) target = $region60
        $region59: #{tpu_custom_call.1} parent=55 // pred_region
          %404 = dma.done %s397, 2048
        $region60: #{tpu_custom_call.1} parent=55 // pred_fallthru
          _
        // Predicated region
        $region61: #{tpu_custom_call.1} parent=55 // pred_check
          %p405 = pneg %p83
        $region62: #{tpu_custom_call.1} parent=55 // pred_check_branch
          %407 = sbr.rel (%p405) target = $region64
        $region63: #{tpu_custom_call.1} parent=55 // pred_region
          %408 = dma.done [#allocation7], 8192
        $region64: #{tpu_custom_call.1} parent=55 // pred_fallthru
          _
        // Predicated region
        $region65: #{tpu_custom_call.1} parent=55 // pred_check
          %p409 = pneg %p104
        $region66: #{tpu_custom_call.1} parent=55 // pred_check_branch
          %411 = sbr.rel (%p409) target = $region68
        $region67: #{tpu_custom_call.1} parent=55 // pred_region
          %412 = dma.done [#allocation7], 64
        $region68: #{tpu_custom_call.1} parent=55 // pred_fallthru
          _
        // Predicated region
        $region69: #{tpu_custom_call.1} parent=55 // pred_check
          %p413 = pneg %p125
        $region70: #{tpu_custom_call.1} parent=55 // pred_check_branch
          %415 = sbr.rel (%p413) target = $region72
        $region71: #{tpu_custom_call.1} parent=55 // pred_region
          %416 = dma.done [#allocation10], 4096
        $region72: #{tpu_custom_call.1} parent=55 // pred_fallthru
          _
        // Predicated region
        $region73: #{tpu_custom_call.1} parent=55 // pred_check
          %p417 = pneg %p167
        $region74: #{tpu_custom_call.1} parent=55 // pred_check_branch
          %419 = sbr.rel (%p417) target = $region76
        $region75: #{tpu_custom_call.1} parent=55 // pred_region
          %420 = dma.done [#allocation10], 4096
        $region76: #{tpu_custom_call.1} parent=55 // pred_fallthru
          _
        // Predicated region
        $region77: #{tpu_custom_call.1} parent=55 // pred_check
          %p421 = pneg %p214
        $region78: #{tpu_custom_call.1} parent=55 // pred_check_branch
          %423 = sbr.rel (%p421) target = $region80
        $region79: #{tpu_custom_call.1} parent=55 // pred_region
          %424 = dma.done [#allocation13], 8192
        $region80: #{tpu_custom_call.1} parent=55 // pred_fallthru
          _
        %s425 = sand.u32 %s49, 1
        %s426 = scalar_lea.sflag [#allocation4], %s425
        %s427 = sand.u32 %s49, 1
        %s428 = smul.addr %s427, 128
        %s429 = scalar_lea.vmem [#allocation3], %s428
        %p430 = pneg %p62
        %p431 = pneg %p59
        %p432 = pneg %p83
        %p433 = pneg %p80
        %p434 = pneg %p104
        %p435 = pneg %p101
        %p436 = pneg %p125
        %p437 = pneg %p122
        %p438 = pneg %p146
        %p439 = pneg %p143
        %p440 = pneg %p167
        %p441 = pneg %p164
        %p442 = pneg %p188
        %p443 = pneg %p185
        %p444 = pneg %p214
        %p445 = pneg %p211
        %s446 = smul.u32 2, %s34
        %p447 = scmp.lt.s32.totalorder %s446, 1
        %s448 = scalar_select %p447, %s446, 1
        %s449 = scalar_lea.vmem %s8, %s448
        %p450 = pneg %p240
        %p451 = pneg %p237
        %p452 = pneg %p268
        %p453 = pneg %p265
        %s454 = sand.u32 %s255, 1
        %s455 = scalar_lea.sflag [#allocation5], %s454
        %s456 = sand.u32 %s255, 1
        %s457 = smul.addr %s456, 64
        %s458 = scalar_lea.vmem [#allocation14], %s457
        %s459 = smul.u32 8, %s33
        %s460 = smul.u32 2, %s34
        %s461 = smul.u32 2, %s34
        %p462 = scmp.lt.s32.totalorder %s461, 1
        %s463 = scalar_select %p462, %s461, 1
        %s464 = scalar_lea.vmem %s8, %s463
        %s465 = smul.u32 2, %s34
        %s466 = smul.u32 8, %s33
        %s467 = smul.u32 2, %s34
        %p469 = scmp.eq.s32.totalorder %s34, 0
        // Predicated region
        $region81: #{tpu_custom_call.1} parent=55 // pred_check
          %p470 = pneg %p469
        $region82: #{tpu_custom_call.1} parent=55 // pred_check_branch
          %472 = sbr.rel (%p470) target = $region84
        $region83: #{tpu_custom_call.1} parent=55 // pred_region
          %v473 = vld [vmem:[%s400] sm:$0xff]
          %v474 = vld [vmem:[%s400 + $0x8] sm:$0xff]
          %v475 = vld [vmem:[%s400 + $0x10] sm:$0xff]
          %v476 = vld [vmem:[%s400 + $0x18] sm:$0xff]
          %v477 = vld [vmem:[%s400 + $0x20] sm:$0xff]
          %v478 = vld [vmem:[%s400 + $0x28] sm:$0xff]
          %v479 = vld [vmem:[%s400 + $0x30] sm:$0xff]
          %v480 = vld [vmem:[%s400 + $0x38] sm:$0xff]
          %v481 = vld [vmem:[%s400 + $0x40] sm:$0xff]
          %v482 = vld [vmem:[%s400 + $0x48] sm:$0xff]
          %v483 = vld [vmem:[%s400 + $0x50] sm:$0xff]
          %v484 = vld [vmem:[%s400 + $0x58] sm:$0xff]
          %v485 = vld [vmem:[%s400 + $0x60] sm:$0xff]
          %v486 = vld [vmem:[%s400 + $0x68] sm:$0xff]
          %v487 = vld [vmem:[%s400 + $0x70] sm:$0xff]
          %v488 = vld [vmem:[%s400 + $0x78] sm:$0xff]
          %v489 = vpack.c.bf16 %v475, %v473
          %v490 = vpack.c.bf16 %v476, %v474
          %v491 = vpack.c.bf16 %v479, %v477
          %v492 = vpack.c.bf16 %v480, %v478
          %v493 = vpack.c.bf16 %v483, %v481
          %v494 = vpack.c.bf16 %v484, %v482
          %v495 = vpack.c.bf16 %v487, %v485
          %v496 = vpack.c.bf16 %v488, %v486
          %v497 = vld [vmem:[#allocation6] sm:$0xff]
          %v498 = vld [vmem:[#allocation6 + $0x8] sm:$0xff]
          %v499 = vld [vmem:[#allocation6 + $0x10] sm:$0xff]
          %v500 = vld [vmem:[#allocation6 + $0x18] sm:$0xff]
          %v501 = vld [vmem:[#allocation6 + $0x20] sm:$0xff]
          %v502 = vld [vmem:[#allocation6 + $0x28] sm:$0xff]
          %v503 = vld [vmem:[#allocation6 + $0x30] sm:$0xff]
          %v504 = vld [vmem:[#allocation6 + $0x38] sm:$0xff]
          %v505 = vld [vmem:[#allocation6 + $0x40] sm:$0xff]
          %v506 = vld [vmem:[#allocation6 + $0x48] sm:$0xff]
          %v507 = vld [vmem:[#allocation6 + $0x50] sm:$0xff]
          %v508 = vld [vmem:[#allocation6 + $0x58] sm:$0xff]
          %v509 = vld [vmem:[#allocation6 + $0x60] sm:$0xff]
          %v510 = vld [vmem:[#allocation6 + $0x68] sm:$0xff]
          %v511 = vld [vmem:[#allocation6 + $0x70] sm:$0xff]
          %v512 = vld [vmem:[#allocation6 + $0x78] sm:$0xff]
          %v513 = vld [vmem:[#allocation6 + $0x80] sm:$0xff]
          %v514 = vld [vmem:[#allocation6 + $0x88] sm:$0xff]
          %v515 = vld [vmem:[#allocation6 + $0x90] sm:$0xff]
          %v516 = vld [vmem:[#allocation6 + $0x98] sm:$0xff]
          %v517 = vld [vmem:[#allocation6 + $0xa0] sm:$0xff]
          %v518 = vld [vmem:[#allocation6 + $0xa8] sm:$0xff]
          %v519 = vld [vmem:[#allocation6 + $0xb0] sm:$0xff]
          %v520 = vld [vmem:[#allocation6 + $0xb8] sm:$0xff]
          %v521 = vld [vmem:[#allocation6 + $0xc0] sm:$0xff]
          %v522 = vld [vmem:[#allocation6 + $0xc8] sm:$0xff]
          %v523 = vld [vmem:[#allocation6 + $0xd0] sm:$0xff]
          %v524 = vld [vmem:[#allocation6 + $0xd8] sm:$0xff]
          %v525 = vld [vmem:[#allocation6 + $0xe0] sm:$0xff]
          %v526 = vld [vmem:[#allocation6 + $0xe8] sm:$0xff]
          %v527 = vld [vmem:[#allocation6 + $0xf0] sm:$0xff]
          %v528 = vld [vmem:[#allocation6 + $0xf8] sm:$0xff]
          %v529 = vld [vmem:[#allocation6 + $0x100] sm:$0xff]
          %v530 = vld [vmem:[#allocation6 + $0x108] sm:$0xff]
          %v531 = vld [vmem:[#allocation6 + $0x110] sm:$0xff]
          %v532 = vld [vmem:[#allocation6 + $0x118] sm:$0xff]
          %v533 = vld [vmem:[#allocation6 + $0x120] sm:$0xff]
          %v534 = vld [vmem:[#allocation6 + $0x128] sm:$0xff]
          %v535 = vld [vmem:[#allocation6 + $0x130] sm:$0xff]
          %v536 = vld [vmem:[#allocation6 + $0x138] sm:$0xff]
          %v537 = vld [vmem:[#allocation6 + $0x140] sm:$0xff]
          %v538 = vld [vmem:[#allocation6 + $0x148] sm:$0xff]
          %v539 = vld [vmem:[#allocation6 + $0x150] sm:$0xff]
          %v540 = vld [vmem:[#allocation6 + $0x158] sm:$0xff]
          %v541 = vld [vmem:[#allocation6 + $0x160] sm:$0xff]
          %v542 = vld [vmem:[#allocation6 + $0x168] sm:$0xff]
          %v543 = vld [vmem:[#allocation6 + $0x170] sm:$0xff]
          %v544 = vld [vmem:[#allocation6 + $0x178] sm:$0xff]
          %v545 = vld [vmem:[#allocation6 + $0x180] sm:$0xff]
          %v546 = vld [vmem:[#allocation6 + $0x188] sm:$0xff]
          %v547 = vld [vmem:[#allocation6 + $0x190] sm:$0xff]
          %v548 = vld [vmem:[#allocation6 + $0x198] sm:$0xff]
          %v549 = vld [vmem:[#allocation6 + $0x1a0] sm:$0xff]
          %v550 = vld [vmem:[#allocation6 + $0x1a8] sm:$0xff]
          %v551 = vld [vmem:[#allocation6 + $0x1b0] sm:$0xff]
          %v552 = vld [vmem:[#allocation6 + $0x1b8] sm:$0xff]
          %v553 = vld [vmem:[#allocation6 + $0x1c0] sm:$0xff]
          %v554 = vld [vmem:[#allocation6 + $0x1c8] sm:$0xff]
          %v555 = vld [vmem:[#allocation6 + $0x1d0] sm:$0xff]
          %v556 = vld [vmem:[#allocation6 + $0x1d8] sm:$0xff]
          %v557 = vld [vmem:[#allocation6 + $0x1e0] sm:$0xff]
          %v558 = vld [vmem:[#allocation6 + $0x1e8] sm:$0xff]
          %v559 = vld [vmem:[#allocation6 + $0x1f0] sm:$0xff]
          %v560 = vld [vmem:[#allocation6 + $0x1f8] sm:$0xff]
          %v561 = vld [vmem:[#allocation8] sm:$0xf]
          %v563 = vlaneseq
          %v564 = vshrl.u32 %v563, 7
          %v565 = vsub.s32 0, %v564
          %v566 = vrot.slane %v561, %v565
          %v567 = vlaneseq
          %v568 = vshrl.u32 %v567, 7
          %v569 = vsub.s32 1, %v568
          %v570 = vrot.slane %v561, %v569
          %v571 = vlaneseq
          %v572 = vshrl.u32 %v571, 7
          %v573 = vsub.s32 2, %v572
          %v574 = vrot.slane %v561, %v573
          %v575 = vlaneseq
          %v576 = vshrl.u32 %v575, 7
          %v577 = vsub.s32 3, %v576
          %v578 = vrot.slane %v561, %v577
          %v647 = vunpack.c.l.b16 %v497
          %v648 = vunpack.c.h.b16 %v497
          %v649 = vunpack.c.l.b16 %v498
          %v650 = vunpack.c.h.b16 %v498
          %v651 = vunpack.c.l.b16 %v499
          %v652 = vunpack.c.h.b16 %v499
          %v653 = vunpack.c.l.b16 %v500
          %v654 = vunpack.c.h.b16 %v500
          %v655 = vunpack.c.l.b16 %v501
          %v656 = vunpack.c.h.b16 %v501
          %v657 = vunpack.c.l.b16 %v502
          %v658 = vunpack.c.h.b16 %v502
          %v659 = vunpack.c.l.b16 %v503
          %v660 = vunpack.c.h.b16 %v503
          %v661 = vunpack.c.l.b16 %v504
          %v662 = vunpack.c.h.b16 %v504
          %v663 = vunpack.c.l.b16 %v505
          %v664 = vunpack.c.h.b16 %v505
          %v665 = vunpack.c.l.b16 %v506
          %v666 = vunpack.c.h.b16 %v506
          %v667 = vunpack.c.l.b16 %v507
          %v668 = vunpack.c.h.b16 %v507
          %v669 = vunpack.c.l.b16 %v508
          %v670 = vunpack.c.h.b16 %v508
          %v671 = vunpack.c.l.b16 %v509
          %v672 = vunpack.c.h.b16 %v509
          %v673 = vunpack.c.l.b16 %v510
          %v674 = vunpack.c.h.b16 %v510
          %v675 = vunpack.c.l.b16 %v511
          %v676 = vunpack.c.h.b16 %v511
          %v677 = vunpack.c.l.b16 %v512
          %v678 = vunpack.c.h.b16 %v512
          %v679 = vunpack.c.l.b16 %v513
          %v680 = vunpack.c.h.b16 %v513
          %v681 = vunpack.c.l.b16 %v514
          %v682 = vunpack.c.h.b16 %v514
          %v683 = vunpack.c.l.b16 %v515
          %v684 = vunpack.c.h.b16 %v515
          %v685 = vunpack.c.l.b16 %v516
          %v686 = vunpack.c.h.b16 %v516
          %v687 = vunpack.c.l.b16 %v517
          %v688 = vunpack.c.h.b16 %v517
          %v689 = vunpack.c.l.b16 %v518
          %v690 = vunpack.c.h.b16 %v518
          %v691 = vunpack.c.l.b16 %v519
          %v692 = vunpack.c.h.b16 %v519
          %v693 = vunpack.c.l.b16 %v520
          %v694 = vunpack.c.h.b16 %v520
          %v695 = vunpack.c.l.b16 %v521
          %v696 = vunpack.c.h.b16 %v521
          %v697 = vunpack.c.l.b16 %v522
          %v698 = vunpack.c.h.b16 %v522
          %v699 = vunpack.c.l.b16 %v523
          %v700 = vunpack.c.h.b16 %v523
          %v701 = vunpack.c.l.b16 %v524
          %v702 = vunpack.c.h.b16 %v524
          %v703 = vunpack.c.l.b16 %v525
          %v704 = vunpack.c.h.b16 %v525
          %v705 = vunpack.c.l.b16 %v526
          %v706 = vunpack.c.h.b16 %v526
          %v707 = vunpack.c.l.b16 %v527
          %v708 = vunpack.c.h.b16 %v527
          %v709 = vunpack.c.l.b16 %v528
          %v710 = vunpack.c.h.b16 %v528
          %v711 = vunpack.c.l.b16 %v529
          %v712 = vunpack.c.h.b16 %v529
          %v713 = vunpack.c.l.b16 %v530
          %v714 = vunpack.c.h.b16 %v530
          %v715 = vunpack.c.l.b16 %v531
          %v716 = vunpack.c.h.b16 %v531
          %v717 = vunpack.c.l.b16 %v532
          %v718 = vunpack.c.h.b16 %v532
          %v719 = vunpack.c.l.b16 %v533
          %v720 = vunpack.c.h.b16 %v533
          %v721 = vunpack.c.l.b16 %v534
          %v722 = vunpack.c.h.b16 %v534
          %v723 = vunpack.c.l.b16 %v535
          %v724 = vunpack.c.h.b16 %v535
          %v725 = vunpack.c.l.b16 %v536
          %v726 = vunpack.c.h.b16 %v536
          %v727 = vunpack.c.l.b16 %v537
          %v728 = vunpack.c.h.b16 %v537
          %v729 = vunpack.c.l.b16 %v538
          %v730 = vunpack.c.h.b16 %v538
          %v731 = vunpack.c.l.b16 %v539
          %v732 = vunpack.c.h.b16 %v539
          %v733 = vunpack.c.l.b16 %v540
          %v734 = vunpack.c.h.b16 %v540
          %v735 = vunpack.c.l.b16 %v541
          %v736 = vunpack.c.h.b16 %v541
          %v737 = vunpack.c.l.b16 %v542
          %v738 = vunpack.c.h.b16 %v542
          %v739 = vunpack.c.l.b16 %v543
          %v740 = vunpack.c.h.b16 %v543
          %v741 = vunpack.c.l.b16 %v544
          %v742 = vunpack.c.h.b16 %v544
          %v743 = vunpack.c.l.b16 %v545
          %v744 = vunpack.c.h.b16 %v545
          %v745 = vunpack.c.l.b16 %v546
          %v746 = vunpack.c.h.b16 %v546
          %v747 = vunpack.c.l.b16 %v547
          %v748 = vunpack.c.h.b16 %v547
          %v749 = vunpack.c.l.b16 %v548
          %v750 = vunpack.c.h.b16 %v548
          %v751 = vunpack.c.l.b16 %v549
          %v752 = vunpack.c.h.b16 %v549
          %v753 = vunpack.c.l.b16 %v550
          %v754 = vunpack.c.h.b16 %v550
          %v755 = vunpack.c.l.b16 %v551
          %v756 = vunpack.c.h.b16 %v551
          %v757 = vunpack.c.l.b16 %v552
          %v758 = vunpack.c.h.b16 %v552
          %v759 = vunpack.c.l.b16 %v553
          %v760 = vunpack.c.h.b16 %v553
          %v761 = vunpack.c.l.b16 %v554
          %v762 = vunpack.c.h.b16 %v554
          %v763 = vunpack.c.l.b16 %v555
          %v764 = vunpack.c.h.b16 %v555
          %v765 = vunpack.c.l.b16 %v556
          %v766 = vunpack.c.h.b16 %v556
          %v767 = vunpack.c.l.b16 %v557
          %v768 = vunpack.c.h.b16 %v557
          %v769 = vunpack.c.l.b16 %v558
          %v770 = vunpack.c.h.b16 %v558
          %v771 = vunpack.c.l.b16 %v559
          %v772 = vunpack.c.h.b16 %v559
          %v773 = vunpack.c.l.b16 %v560
          %v774 = vunpack.c.h.b16 %v560
          %v775 = vpack.c.b16 %v651, %v647
          %v776 = vpack.c.b16 %v652, %v648
          %v777 = vpack.c.b16 %v653, %v649
          %v778 = vpack.c.b16 %v654, %v650
          %v779 = vpack.c.b16 %v659, %v655
          %v780 = vpack.c.b16 %v660, %v656
          %v781 = vpack.c.b16 %v661, %v657
          %v782 = vpack.c.b16 %v662, %v658
          %v783 = vpack.c.b16 %v667, %v663
          %v784 = vpack.c.b16 %v668, %v664
          %v785 = vpack.c.b16 %v669, %v665
          %v786 = vpack.c.b16 %v670, %v666
          %v787 = vpack.c.b16 %v675, %v671
          %v788 = vpack.c.b16 %v676, %v672
          %v789 = vpack.c.b16 %v677, %v673
          %v790 = vpack.c.b16 %v678, %v674
          %v791 = vpack.c.b16 %v683, %v679
          %v792 = vpack.c.b16 %v684, %v680
          %v793 = vpack.c.b16 %v685, %v681
          %v794 = vpack.c.b16 %v686, %v682
          %v795 = vpack.c.b16 %v691, %v687
          %v796 = vpack.c.b16 %v692, %v688
          %v797 = vpack.c.b16 %v693, %v689
          %v798 = vpack.c.b16 %v694, %v690
          %v799 = vpack.c.b16 %v699, %v695
          %v800 = vpack.c.b16 %v700, %v696
          %v801 = vpack.c.b16 %v701, %v697
          %v802 = vpack.c.b16 %v702, %v698
          %v803 = vpack.c.b16 %v707, %v703
          %v804 = vpack.c.b16 %v708, %v704
          %v805 = vpack.c.b16 %v709, %v705
          %v806 = vpack.c.b16 %v710, %v706
          %v807 = vpack.c.b16 %v715, %v711
          %v808 = vpack.c.b16 %v716, %v712
          %v809 = vpack.c.b16 %v717, %v713
          %v810 = vpack.c.b16 %v718, %v714
          %v811 = vpack.c.b16 %v723, %v719
          %v812 = vpack.c.b16 %v724, %v720
          %v813 = vpack.c.b16 %v725, %v721
          %v814 = vpack.c.b16 %v726, %v722
          %v815 = vpack.c.b16 %v731, %v727
          %v816 = vpack.c.b16 %v732, %v728
          %v817 = vpack.c.b16 %v733, %v729
          %v818 = vpack.c.b16 %v734, %v730
          %v819 = vpack.c.b16 %v739, %v735
          %v820 = vpack.c.b16 %v740, %v736
          %v821 = vpack.c.b16 %v741, %v737
          %v822 = vpack.c.b16 %v742, %v738
          %v823 = vpack.c.b16 %v747, %v743
          %v824 = vpack.c.b16 %v748, %v744
          %v825 = vpack.c.b16 %v749, %v745
          %v826 = vpack.c.b16 %v750, %v746
          %v827 = vpack.c.b16 %v755, %v751
          %v828 = vpack.c.b16 %v756, %v752
          %v829 = vpack.c.b16 %v757, %v753
          %v830 = vpack.c.b16 %v758, %v754
          %v831 = vpack.c.b16 %v763, %v759
          %v832 = vpack.c.b16 %v764, %v760
          %v833 = vpack.c.b16 %v765, %v761
          %v834 = vpack.c.b16 %v766, %v762
          %v835 = vpack.c.b16 %v771, %v767
          %v836 = vpack.c.b16 %v772, %v768
          %v837 = vpack.c.b16 %v773, %v769
          %v838 = vpack.c.b16 %v774, %v770
          %903 = vmatprep.subr.bf16.mxu0 %v804
          %904 = vmatpush1.bf16.msra.mxu0 %v803
          %905 = vmatprep.subr.bf16.mxu0 %v800
          %906 = vmatpush1.bf16.msra.mxu0 %v799
          %907 = vmatprep.subr.bf16.mxu0 %v796
          %908 = vmatpush1.bf16.msra.mxu0 %v795
          %909 = vmatprep.subr.bf16.mxu0 %v792
          %910 = vmatpush1.bf16.msra.mxu0 %v791
          %911 = vmatprep.subr.bf16.mxu0 %v788
          %912 = vmatpush1.bf16.msra.mxu0 %v787
          %913 = vmatprep.subr.bf16.mxu0 %v784
          %914 = vmatpush1.bf16.msra.mxu0 %v783
          %915 = vmatprep.subr.bf16.mxu0 %v780
          %916 = vmatpush1.bf16.msra.mxu0 %v779
          %917 = vmatprep.subr.bf16.mxu0 %v776
          %918 = vmatpush1.bf16.msra.mxu0 %v775
          %919 = vmatprep.subr.bf16.mxu0 %v836
          %920 = vmatpush2.bf16.msra.mxu0 %v835
          %921 = vmatprep.subr.bf16.mxu0 %v832
          %922 = vmatpush2.bf16.msra.mxu0 %v831
          %923 = vmatprep.subr.bf16.mxu0 %v828
          %924 = vmatpush2.bf16.msra.mxu0 %v827
          %925 = vmatprep.subr.bf16.mxu0 %v824
          %926 = vmatpush2.bf16.msra.mxu0 %v823
          %927 = vmatprep.subr.bf16.mxu0 %v820
          %928 = vmatpush2.bf16.msra.mxu0 %v819
          %929 = vmatprep.subr.bf16.mxu0 %v816
          %930 = vmatpush2.bf16.msra.mxu0 %v815
          %931 = vmatprep.subr.bf16.mxu0 %v812
          %932 = vmatpush2.bf16.msra.mxu0 %v811
          %933 = vmatprep.subr.bf16.mxu0 %v808
          %934 = vmatpush2.bf16.msra.mxu0 %v807
          %935 = vmatprep.mubr.bf16.mxu0 %v490
          %936 = vmatmul.mubr.bf16.gmra.mxu0 %v489
          %v937 = vpop.f32.mrf.mxu0
          %v938 = vadd.f32 %v566, %v937
          %v939 = vpop.f32.mrf.mxu0
          %v940 = vadd.f32 %v570, %v939
          %v941 = vpop.f32.mrf.mxu0
          %v942 = vadd.f32 %v566, %v941
          %v943 = vpop.f32.mrf.mxu0
          %v944 = vadd.f32 %v570, %v943
          %945 = vmatprep.mubr.bf16.mxu0 %v492
          %946 = vmatmul.mubr.bf16.gmra.mxu0 %v491
          %v947 = vpop.f32.mrf.mxu0
          %v948 = vadd.f32 %v566, %v947
          %v949 = vpop.f32.mrf.mxu0
          %v950 = vadd.f32 %v570, %v949
          %v951 = vpop.f32.mrf.mxu0
          %v952 = vadd.f32 %v566, %v951
          %v953 = vpop.f32.mrf.mxu0
          %v954 = vadd.f32 %v570, %v953
          %955 = vmatprep.mubr.bf16.mxu0 %v494
          %956 = vmatmul.mubr.bf16.gmra.mxu0 %v493
          %v957 = vpop.f32.mrf.mxu0
          %v958 = vadd.f32 %v566, %v957
          %v959 = vpop.f32.mrf.mxu0
          %v960 = vadd.f32 %v570, %v959
          %v961 = vpop.f32.mrf.mxu0
          %v962 = vadd.f32 %v566, %v961
          %v963 = vpop.f32.mrf.mxu0
          %v964 = vadd.f32 %v570, %v963
          %965 = vmatprep.mubr.bf16.mxu0 %v496
          %966 = vmatmul.mubr.bf16.gmra.mxu0 %v495
          %v967 = vpop.f32.mrf.mxu0
          %v968 = vadd.f32 %v566, %v967
          %v969 = vpop.f32.mrf.mxu0
          %v970 = vadd.f32 %v570, %v969
          %v971 = vpop.f32.mrf.mxu0
          %v972 = vadd.f32 %v566, %v971
          %v973 = vpop.f32.mrf.mxu0
          %v974 = vadd.f32 %v570, %v973
          %975 = vdwg.mxu0
          %976 = vmatprep.subr.bf16.mxu0 %v806
          %977 = vmatpush1.bf16.msra.mxu0 %v805
          %978 = vmatprep.subr.bf16.mxu0 %v802
          %979 = vmatpush1.bf16.msra.mxu0 %v801
          %980 = vmatprep.subr.bf16.mxu0 %v798
          %981 = vmatpush1.bf16.msra.mxu0 %v797
          %982 = vmatprep.subr.bf16.mxu0 %v794
          %983 = vmatpush1.bf16.msra.mxu0 %v793
          %984 = vmatprep.subr.bf16.mxu0 %v790
          %985 = vmatpush1.bf16.msra.mxu0 %v789
          %986 = vmatprep.subr.bf16.mxu0 %v786
          %987 = vmatpush1.bf16.msra.mxu0 %v785
          %988 = vmatprep.subr.bf16.mxu0 %v782
          %989 = vmatpush1.bf16.msra.mxu0 %v781
          %990 = vmatprep.subr.bf16.mxu0 %v778
          %991 = vmatpush1.bf16.msra.mxu0 %v777
          %992 = vmatprep.subr.bf16.mxu0 %v838
          %993 = vmatpush2.bf16.msra.mxu0 %v837
          %994 = vmatprep.subr.bf16.mxu0 %v834
          %995 = vmatpush2.bf16.msra.mxu0 %v833
          %996 = vmatprep.subr.bf16.mxu0 %v830
          %997 = vmatpush2.bf16.msra.mxu0 %v829
          %998 = vmatprep.subr.bf16.mxu0 %v826
          %999 = vmatpush2.bf16.msra.mxu0 %v825
          %1000 = vmatprep.subr.bf16.mxu0 %v822
          %1001 = vmatpush2.bf16.msra.mxu0 %v821
          %1002 = vmatprep.subr.bf16.mxu0 %v818
          %1003 = vmatpush2.bf16.msra.mxu0 %v817
          %1004 = vmatprep.subr.bf16.mxu0 %v814
          %1005 = vmatpush2.bf16.msra.mxu0 %v813
          %1006 = vmatprep.subr.bf16.mxu0 %v810
          %1007 = vmatpush2.bf16.msra.mxu0 %v809
          %1008 = vmatprep.mubr.bf16.mxu0 %v490
          %1009 = vmatmul.mubr.bf16.gmra.mxu0 %v489
          %v1010 = vpop.f32.mrf.mxu0
          %v1011 = vadd.f32 %v574, %v1010
          %v1012 = vpop.f32.mrf.mxu0
          %v1013 = vadd.f32 %v578, %v1012
          %v1014 = vpop.f32.mrf.mxu0
          %v1015 = vadd.f32 %v574, %v1014
          %v1016 = vpop.f32.mrf.mxu0
          %v1017 = vadd.f32 %v578, %v1016
          %1018 = vmatprep.mubr.bf16.mxu0 %v492
          %1019 = vmatmul.mubr.bf16.gmra.mxu0 %v491
          %v1020 = vpop.f32.mrf.mxu0
          %v1021 = vadd.f32 %v574, %v1020
          %v1022 = vpop.f32.mrf.mxu0
          %v1023 = vadd.f32 %v578, %v1022
          %v1024 = vpop.f32.mrf.mxu0
          %v1025 = vadd.f32 %v574, %v1024
          %v1026 = vpop.f32.mrf.mxu0
          %v1027 = vadd.f32 %v578, %v1026
          %1028 = vmatprep.mubr.bf16.mxu0 %v494
          %1029 = vmatmul.mubr.bf16.gmra.mxu0 %v493
          %v1030 = vpop.f32.mrf.mxu0
          %v1031 = vadd.f32 %v574, %v1030
          %v1032 = vpop.f32.mrf.mxu0
          %v1033 = vadd.f32 %v578, %v1032
          %v1034 = vpop.f32.mrf.mxu0
          %v1035 = vadd.f32 %v574, %v1034
          %v1036 = vpop.f32.mrf.mxu0
          %v1037 = vadd.f32 %v578, %v1036
          %1038 = vmatprep.mubr.bf16.mxu0 %v496
          %1039 = vmatmul.mubr.bf16.gmra.mxu0 %v495
          %v1040 = vpop.f32.mrf.mxu0
          %v1041 = vadd.f32 %v574, %v1040
          %v1042 = vpop.f32.mrf.mxu0
          %v1043 = vadd.f32 %v578, %v1042
          %v1044 = vpop.f32.mrf.mxu0
          %v1045 = vadd.f32 %v574, %v1044
          %v1046 = vpop.f32.mrf.mxu0
          %v1047 = vadd.f32 %v578, %v1046
          %1048 = vdwg.mxu0
          %v1049 = vmax.f32 %v938, 0.0
          %v1050 = vmax.f32 %v940, 0.0
          %v1051 = vmax.f32 %v1011, 0.0
          %v1052 = vmax.f32 %v1013, 0.0
          %v1053 = vmax.f32 %v942, 0.0
          %v1054 = vmax.f32 %v944, 0.0
          %v1055 = vmax.f32 %v1015, 0.0
          %v1056 = vmax.f32 %v1017, 0.0
          %v1057 = vmax.f32 %v948, 0.0
          %v1058 = vmax.f32 %v950, 0.0
          %v1059 = vmax.f32 %v1021, 0.0
          %v1060 = vmax.f32 %v1023, 0.0
          %v1061 = vmax.f32 %v952, 0.0
          %v1062 = vmax.f32 %v954, 0.0
          %v1063 = vmax.f32 %v1025, 0.0
          %v1064 = vmax.f32 %v1027, 0.0
          %v1065 = vmax.f32 %v958, 0.0
          %v1066 = vmax.f32 %v960, 0.0
          %v1067 = vmax.f32 %v1031, 0.0
          %v1068 = vmax.f32 %v1033, 0.0
          %v1069 = vmax.f32 %v962, 0.0
          %v1070 = vmax.f32 %v964, 0.0
          %v1071 = vmax.f32 %v1035, 0.0
          %v1072 = vmax.f32 %v1037, 0.0
          %v1073 = vmax.f32 %v968, 0.0
          %v1074 = vmax.f32 %v970, 0.0
          %v1075 = vmax.f32 %v1041, 0.0
          %v1076 = vmax.f32 %v1043, 0.0
          %v1077 = vmax.f32 %v972, 0.0
          %v1078 = vmax.f32 %v974, 0.0
          %v1079 = vmax.f32 %v1045, 0.0
          %v1080 = vmax.f32 %v1047, 0.0
          %v1081 = vpack.c.bf16 %v1053, %v1049
          %v1082 = vpack.c.bf16 %v1054, %v1050
          %v1083 = vpack.c.bf16 %v1055, %v1051
          %v1084 = vpack.c.bf16 %v1056, %v1052
          %v1085 = vpack.c.bf16 %v1061, %v1057
          %v1086 = vpack.c.bf16 %v1062, %v1058
          %v1087 = vpack.c.bf16 %v1063, %v1059
          %v1088 = vpack.c.bf16 %v1064, %v1060
          %v1089 = vpack.c.bf16 %v1069, %v1065
          %v1090 = vpack.c.bf16 %v1070, %v1066
          %v1091 = vpack.c.bf16 %v1071, %v1067
          %v1092 = vpack.c.bf16 %v1072, %v1068
          %v1093 = vpack.c.bf16 %v1077, %v1073
          %v1094 = vpack.c.bf16 %v1078, %v1074
          %v1095 = vpack.c.bf16 %v1079, %v1075
          %v1096 = vpack.c.bf16 %v1080, %v1076
          %v1097 = vld [vmem:[#allocation9] sm:$0xf]
          %v1098 = vld [vmem:[#allocation9 + $0x4] sm:$0xf]
          %v1099 = vld [vmem:[#allocation9 + $0x8] sm:$0xf]
          %v1100 = vld [vmem:[#allocation9 + $0xc] sm:$0xf]
          %v1101 = vld [vmem:[#allocation9 + $0x10] sm:$0xf]
          %v1102 = vld [vmem:[#allocation9 + $0x14] sm:$0xf]
          %v1103 = vld [vmem:[#allocation9 + $0x18] sm:$0xf]
          %v1104 = vld [vmem:[#allocation9 + $0x1c] sm:$0xf]
          %v1105 = vld [vmem:[#allocation9 + $0x20] sm:$0xf]
          %v1106 = vld [vmem:[#allocation9 + $0x24] sm:$0xf]
          %v1107 = vld [vmem:[#allocation9 + $0x28] sm:$0xf]
          %v1108 = vld [vmem:[#allocation9 + $0x2c] sm:$0xf]
          %v1109 = vld [vmem:[#allocation9 + $0x30] sm:$0xf]
          %v1110 = vld [vmem:[#allocation9 + $0x34] sm:$0xf]
          %v1111 = vld [vmem:[#allocation9 + $0x38] sm:$0xf]
          %v1112 = vld [vmem:[#allocation9 + $0x3c] sm:$0xf]
          %v1113 = vld [vmem:[#allocation9 + $0x40] sm:$0xf]
          %v1114 = vld [vmem:[#allocation9 + $0x44] sm:$0xf]
          %v1115 = vld [vmem:[#allocation9 + $0x48] sm:$0xf]
          %v1116 = vld [vmem:[#allocation9 + $0x4c] sm:$0xf]
          %v1117 = vld [vmem:[#allocation9 + $0x50] sm:$0xf]
          %v1118 = vld [vmem:[#allocation9 + $0x54] sm:$0xf]
          %v1119 = vld [vmem:[#allocation9 + $0x58] sm:$0xf]
          %v1120 = vld [vmem:[#allocation9 + $0x5c] sm:$0xf]
          %v1121 = vld [vmem:[#allocation9 + $0x60] sm:$0xf]
          %v1122 = vld [vmem:[#allocation9 + $0x64] sm:$0xf]
          %v1123 = vld [vmem:[#allocation9 + $0x68] sm:$0xf]
          %v1124 = vld [vmem:[#allocation9 + $0x6c] sm:$0xf]
          %v1125 = vld [vmem:[#allocation9 + $0x70] sm:$0xf]
          %v1126 = vld [vmem:[#allocation9 + $0x74] sm:$0xf]
          %v1127 = vld [vmem:[#allocation9 + $0x78] sm:$0xf]
          %v1128 = vld [vmem:[#allocation9 + $0x7c] sm:$0xf]
          %v1129 = vld [vmem:[#allocation9 + $0x80] sm:$0xf]
          %v1130 = vld [vmem:[#allocation9 + $0x84] sm:$0xf]
          %v1131 = vld [vmem:[#allocation9 + $0x88] sm:$0xf]
          %v1132 = vld [vmem:[#allocation9 + $0x8c] sm:$0xf]
          %v1133 = vld [vmem:[#allocation9 + $0x90] sm:$0xf]
          %v1134 = vld [vmem:[#allocation9 + $0x94] sm:$0xf]
          %v1135 = vld [vmem:[#allocation9 + $0x98] sm:$0xf]
          %v1136 = vld [vmem:[#allocation9 + $0x9c] sm:$0xf]
          %v1137 = vld [vmem:[#allocation9 + $0xa0] sm:$0xf]
          %v1138 = vld [vmem:[#allocation9 + $0xa4] sm:$0xf]
          %v1139 = vld [vmem:[#allocation9 + $0xa8] sm:$0xf]
          %v1140 = vld [vmem:[#allocation9 + $0xac] sm:$0xf]
          %v1141 = vld [vmem:[#allocation9 + $0xb0] sm:$0xf]
          %v1142 = vld [vmem:[#allocation9 + $0xb4] sm:$0xf]
          %v1143 = vld [vmem:[#allocation9 + $0xb8] sm:$0xf]
          %v1144 = vld [vmem:[#allocation9 + $0xbc] sm:$0xf]
          %v1145 = vld [vmem:[#allocation9 + $0xc0] sm:$0xf]
          %v1146 = vld [vmem:[#allocation9 + $0xc4] sm:$0xf]
          %v1147 = vld [vmem:[#allocation9 + $0xc8] sm:$0xf]
          %v1148 = vld [vmem:[#allocation9 + $0xcc] sm:$0xf]
          %v1149 = vld [vmem:[#allocation9 + $0xd0] sm:$0xf]
          %v1150 = vld [vmem:[#allocation9 + $0xd4] sm:$0xf]
          %v1151 = vld [vmem:[#allocation9 + $0xd8] sm:$0xf]
          %v1152 = vld [vmem:[#allocation9 + $0xdc] sm:$0xf]
          %v1153 = vld [vmem:[#allocation9 + $0xe0] sm:$0xf]
          %v1154 = vld [vmem:[#allocation9 + $0xe4] sm:$0xf]
          %v1155 = vld [vmem:[#allocation9 + $0xe8] sm:$0xf]
          %v1156 = vld [vmem:[#allocation9 + $0xec] sm:$0xf]
          %v1157 = vld [vmem:[#allocation9 + $0xf0] sm:$0xf]
          %v1158 = vld [vmem:[#allocation9 + $0xf4] sm:$0xf]
          %v1159 = vld [vmem:[#allocation9 + $0xf8] sm:$0xf]
          %v1160 = vld [vmem:[#allocation9 + $0xfc] sm:$0xf]
          %v1161 = vld [vmem:[%s4] sm:$0x1]
          %v1163 = vlaneseq
          %v1164 = vshrl.u32 %v1163, 7
          %v1165 = vsub.s32 0, %v1164
          %v1166 = vrot.slane %v1161, %v1165
          %v1232 = vunpack.c.l.b16 %v1097
          %v1233 = vunpack.c.l.b16 %v1098
          %v1234 = vunpack.c.l.b16 %v1099
          %v1235 = vunpack.c.l.b16 %v1100
          %v1236 = vunpack.c.l.b16 %v1101
          %v1237 = vunpack.c.l.b16 %v1102
          %v1238 = vunpack.c.l.b16 %v1103
          %v1239 = vunpack.c.l.b16 %v1104
          %v1240 = vunpack.c.l.b16 %v1105
          %v1241 = vunpack.c.l.b16 %v1106
          %v1242 = vunpack.c.l.b16 %v1107
          %v1243 = vunpack.c.l.b16 %v1108
          %v1244 = vunpack.c.l.b16 %v1109
          %v1245 = vunpack.c.l.b16 %v1110
          %v1246 = vunpack.c.l.b16 %v1111
          %v1247 = vunpack.c.l.b16 %v1112
          %v1248 = vunpack.c.l.b16 %v1113
          %v1249 = vunpack.c.l.b16 %v1114
          %v1250 = vunpack.c.l.b16 %v1115
          %v1251 = vunpack.c.l.b16 %v1116
          %v1252 = vunpack.c.l.b16 %v1117
          %v1253 = vunpack.c.l.b16 %v1118
          %v1254 = vunpack.c.l.b16 %v1119
          %v1255 = vunpack.c.l.b16 %v1120
          %v1256 = vunpack.c.l.b16 %v1121
          %v1257 = vunpack.c.l.b16 %v1122
          %v1258 = vunpack.c.l.b16 %v1123
          %v1259 = vunpack.c.l.b16 %v1124
          %v1260 = vunpack.c.l.b16 %v1125
          %v1261 = vunpack.c.l.b16 %v1126
          %v1262 = vunpack.c.l.b16 %v1127
          %v1263 = vunpack.c.l.b16 %v1128
          %v1264 = vunpack.c.l.b16 %v1129
          %v1265 = vunpack.c.l.b16 %v1130
          %v1266 = vunpack.c.l.b16 %v1131
          %v1267 = vunpack.c.l.b16 %v1132
          %v1268 = vunpack.c.l.b16 %v1133
          %v1269 = vunpack.c.l.b16 %v1134
          %v1270 = vunpack.c.l.b16 %v1135
          %v1271 = vunpack.c.l.b16 %v1136
          %v1272 = vunpack.c.l.b16 %v1137
          %v1273 = vunpack.c.l.b16 %v1138
          %v1274 = vunpack.c.l.b16 %v1139
          %v1275 = vunpack.c.l.b16 %v1140
          %v1276 = vunpack.c.l.b16 %v1141
          %v1277 = vunpack.c.l.b16 %v1142
          %v1278 = vunpack.c.l.b16 %v1143
          %v1279 = vunpack.c.l.b16 %v1144
          %v1280 = vunpack.c.l.b16 %v1145
          %v1281 = vunpack.c.l.b16 %v1146
          %v1282 = vunpack.c.l.b16 %v1147
          %v1283 = vunpack.c.l.b16 %v1148
          %v1284 = vunpack.c.l.b16 %v1149
          %v1285 = vunpack.c.l.b16 %v1150
          %v1286 = vunpack.c.l.b16 %v1151
          %v1287 = vunpack.c.l.b16 %v1152
          %v1288 = vunpack.c.l.b16 %v1153
          %v1289 = vunpack.c.l.b16 %v1154
          %v1290 = vunpack.c.l.b16 %v1155
          %v1291 = vunpack.c.l.b16 %v1156
          %v1292 = vunpack.c.l.b16 %v1157
          %v1293 = vunpack.c.l.b16 %v1158
          %v1294 = vunpack.c.l.b16 %v1159
          %v1295 = vunpack.c.l.b16 %v1160
          %v1296 = vpack.c.b16 %v1233, %v1232
          %v1297 = vpack.c.b16 %v1235, %v1234
          %v1298 = vpack.c.b16 %v1237, %v1236
          %v1299 = vpack.c.b16 %v1239, %v1238
          %v1300 = vpack.c.b16 %v1241, %v1240
          %v1301 = vpack.c.b16 %v1243, %v1242
          %v1302 = vpack.c.b16 %v1245, %v1244
          %v1303 = vpack.c.b16 %v1247, %v1246
          %v1304 = vpack.c.b16 %v1249, %v1248
          %v1305 = vpack.c.b16 %v1251, %v1250
          %v1306 = vpack.c.b16 %v1253, %v1252
          %v1307 = vpack.c.b16 %v1255, %v1254
          %v1308 = vpack.c.b16 %v1257, %v1256
          %v1309 = vpack.c.b16 %v1259, %v1258
          %v1310 = vpack.c.b16 %v1261, %v1260
          %v1311 = vpack.c.b16 %v1263, %v1262
          %v1312 = vpack.c.b16 %v1265, %v1264
          %v1313 = vpack.c.b16 %v1267, %v1266
          %v1314 = vpack.c.b16 %v1269, %v1268
          %v1315 = vpack.c.b16 %v1271, %v1270
          %v1316 = vpack.c.b16 %v1273, %v1272
          %v1317 = vpack.c.b16 %v1275, %v1274
          %v1318 = vpack.c.b16 %v1277, %v1276
          %v1319 = vpack.c.b16 %v1279, %v1278
          %v1320 = vpack.c.b16 %v1281, %v1280
          %v1321 = vpack.c.b16 %v1283, %v1282
          %v1322 = vpack.c.b16 %v1285, %v1284
          %v1323 = vpack.c.b16 %v1287, %v1286
          %v1324 = vpack.c.b16 %v1289, %v1288
          %v1325 = vpack.c.b16 %v1291, %v1290
          %v1326 = vpack.c.b16 %v1293, %v1292
          %v1327 = vpack.c.b16 %v1295, %v1294
          %1360 = vmatprep.subr.bf16.mxu0 0
          %1361 = vmatpush1.bf16.msra.mxu0 %v1303
          %1362 = vmatprep.subr.bf16.mxu0 0
          %1363 = vmatpush1.bf16.msra.mxu0 %v1302
          %1364 = vmatprep.subr.bf16.mxu0 0
          %1365 = vmatpush1.bf16.msra.mxu0 %v1301
          %1366 = vmatprep.subr.bf16.mxu0 0
          %1367 = vmatpush1.bf16.msra.mxu0 %v1300
          %1368 = vmatprep.subr.bf16.mxu0 0
          %1369 = vmatpush1.bf16.msra.mxu0 %v1299
          %1370 = vmatprep.subr.bf16.mxu0 0
          %1371 = vmatpush1.bf16.msra.mxu0 %v1298
          %1372 = vmatprep.subr.bf16.mxu0 0
          %1373 = vmatpush1.bf16.msra.mxu0 %v1297
          %1374 = vmatprep.subr.bf16.mxu0 0
          %1375 = vmatpush1.bf16.msra.mxu0 %v1296
          %1376 = vmatprep.subr.bf16.mxu0 0
          %1377 = vmatpush2.bf16.msra.mxu0 %v1311
          %1378 = vmatprep.subr.bf16.mxu0 0
          %1379 = vmatpush2.bf16.msra.mxu0 %v1310
          %1380 = vmatprep.subr.bf16.mxu0 0
          %1381 = vmatpush2.bf16.msra.mxu0 %v1309
          %1382 = vmatprep.subr.bf16.mxu0 0
          %1383 = vmatpush2.bf16.msra.mxu0 %v1308
          %1384 = vmatprep.subr.bf16.mxu0 0
          %1385 = vmatpush2.bf16.msra.mxu0 %v1307
          %1386 = vmatprep.subr.bf16.mxu0 0
          %1387 = vmatpush2.bf16.msra.mxu0 %v1306
          %1388 = vmatprep.subr.bf16.mxu0 0
          %1389 = vmatpush2.bf16.msra.mxu0 %v1305
          %1390 = vmatprep.subr.bf16.mxu0 0
          %1391 = vmatpush2.bf16.msra.mxu0 %v1304
          %1392 = vmatprep.mubr.bf16.mxu0 %v1082
          %1393 = vmatmul.mubr.bf16.gmra.mxu0 %v1081
          %v1394 = vpop.f32.mrf.mxu0
          %v1395 = vadd.f32 %v1166, %v1394
          %v1396 = vpop.f32.mrf.mxu0
          %v1397 = vpop.f32.mrf.mxu0
          %v1398 = vadd.f32 %v1166, %v1397
          %v1399 = vpop.f32.mrf.mxu0
          %1400 = vmatprep.mubr.bf16.mxu0 %v1086
          %1401 = vmatmul.mubr.bf16.gmra.mxu0 %v1085
          %v1402 = vpop.f32.mrf.mxu0
          %v1403 = vadd.f32 %v1166, %v1402
          %v1404 = vpop.f32.mrf.mxu0
          %v1405 = vpop.f32.mrf.mxu0
          %v1406 = vadd.f32 %v1166, %v1405
          %v1407 = vpop.f32.mrf.mxu0
          %1408 = vmatprep.mubr.bf16.mxu0 %v1090
          %1409 = vmatmul.mubr.bf16.gmra.mxu0 %v1089
          %v1410 = vpop.f32.mrf.mxu0
          %v1411 = vadd.f32 %v1166, %v1410
          %v1412 = vpop.f32.mrf.mxu0
          %v1413 = vpop.f32.mrf.mxu0
          %v1414 = vadd.f32 %v1166, %v1413
          %v1415 = vpop.f32.mrf.mxu0
          %1416 = vmatprep.mubr.bf16.mxu0 %v1094
          %1417 = vmatmul.mubr.bf16.gmra.mxu0 %v1093
          %v1418 = vpop.f32.mrf.mxu0
          %v1419 = vadd.f32 %v1166, %v1418
          %v1420 = vpop.f32.mrf.mxu0
          %v1421 = vpop.f32.mrf.mxu0
          %v1422 = vadd.f32 %v1166, %v1421
          %v1423 = vpop.f32.mrf.mxu0
          %1424 = vdwg.mxu0
          %1425 = vmatprep.subr.bf16.mxu0 0
          %1426 = vmatpush1.bf16.msra.mxu0 %v1319
          %1427 = vmatprep.subr.bf16.mxu0 0
          %1428 = vmatpush1.bf16.msra.mxu0 %v1318
          %1429 = vmatprep.subr.bf16.mxu0 0
          %1430 = vmatpush1.bf16.msra.mxu0 %v1317
          %1431 = vmatprep.subr.bf16.mxu0 0
          %1432 = vmatpush1.bf16.msra.mxu0 %v1316
          %1433 = vmatprep.subr.bf16.mxu0 0
          %1434 = vmatpush1.bf16.msra.mxu0 %v1315
          %1435 = vmatprep.subr.bf16.mxu0 0
          %1436 = vmatpush1.bf16.msra.mxu0 %v1314
          %1437 = vmatprep.subr.bf16.mxu0 0
          %1438 = vmatpush1.bf16.msra.mxu0 %v1313
          %1439 = vmatprep.subr.bf16.mxu0 0
          %1440 = vmatpush1.bf16.msra.mxu0 %v1312
          %1441 = vmatprep.subr.bf16.mxu0 0
          %1442 = vmatpush2.bf16.msra.mxu0 %v1327
          %1443 = vmatprep.subr.bf16.mxu0 0
          %1444 = vmatpush2.bf16.msra.mxu0 %v1326
          %1445 = vmatprep.subr.bf16.mxu0 0
          %1446 = vmatpush2.bf16.msra.mxu0 %v1325
          %1447 = vmatprep.subr.bf16.mxu0 0
          %1448 = vmatpush2.bf16.msra.mxu0 %v1324
          %1449 = vmatprep.subr.bf16.mxu0 0
          %1450 = vmatpush2.bf16.msra.mxu0 %v1323
          %1451 = vmatprep.subr.bf16.mxu0 0
          %1452 = vmatpush2.bf16.msra.mxu0 %v1322
          %1453 = vmatprep.subr.bf16.mxu0 0
          %1454 = vmatpush2.bf16.msra.mxu0 %v1321
          %1455 = vmatprep.subr.bf16.mxu0 0
          %1456 = vmatpush2.bf16.msra.mxu0 %v1320
          %1457 = vmatprep.mubr.bf16.mxu0 %v1084
          %1458 = vmatmul.mubr.bf16.gmra.mxu0 %v1083
          %v1459 = vpop.f32.mrf.mxu0
          %v1460 = vadd.f32 %v1395, %v1459
          %v1461 = vpop.f32.mrf.mxu0
          %v1462 = vpop.f32.mrf.mxu0
          %v1463 = vadd.f32 %v1398, %v1462
          %v1464 = vpop.f32.mrf.mxu0
          %1465 = vmatprep.mubr.bf16.mxu0 %v1088
          %1466 = vmatmul.mubr.bf16.gmra.mxu0 %v1087
          %v1467 = vpop.f32.mrf.mxu0
          %v1468 = vadd.f32 %v1403, %v1467
          %v1469 = vpop.f32.mrf.mxu0
          %v1470 = vpop.f32.mrf.mxu0
          %v1471 = vadd.f32 %v1406, %v1470
          %v1472 = vpop.f32.mrf.mxu0
          %1473 = vmatprep.mubr.bf16.mxu0 %v1092
          %1474 = vmatmul.mubr.bf16.gmra.mxu0 %v1091
          %v1475 = vpop.f32.mrf.mxu0
          %v1476 = vadd.f32 %v1411, %v1475
          %v1477 = vpop.f32.mrf.mxu0
          %v1478 = vpop.f32.mrf.mxu0
          %v1479 = vadd.f32 %v1414, %v1478
          %v1480 = vpop.f32.mrf.mxu0
          %1481 = vmatprep.mubr.bf16.mxu0 %v1096
          %1482 = vmatmul.mubr.bf16.gmra.mxu0 %v1095
          %v1483 = vpop.f32.mrf.mxu0
          %v1484 = vadd.f32 %v1419, %v1483
          %v1485 = vpop.f32.mrf.mxu0
          %v1486 = vpop.f32.mrf.mxu0
          %v1487 = vadd.f32 %v1422, %v1486
          %v1488 = vpop.f32.mrf.mxu0
          %1489 = vdwg.mxu0
          %v1490 = vmax.f32 %v1460, 0.0
          %v1491 = vmax.f32 %v1463, 0.0
          %v1492 = vmax.f32 %v1468, 0.0
          %v1493 = vmax.f32 %v1471, 0.0
          %v1494 = vmax.f32 %v1476, 0.0
          %v1495 = vmax.f32 %v1479, 0.0
          %v1496 = vmax.f32 %v1484, 0.0
          %v1497 = vmax.f32 %v1487, 0.0
          %v1498 = vpack.c.bf16 %v1491, %v1490
          %v1499 = vpack.c.bf16 %v1493, %v1492
          %v1500 = vpack.c.bf16 %v1495, %v1494
          %v1501 = vpack.c.bf16 %v1497, %v1496
          %v1502 = vld [vmem:[#allocation11] sm:$0xff]
          %v1503 = vld [vmem:[#allocation11 + $0x8] sm:$0xff]
          %v1504 = vld [vmem:[#allocation11 + $0x10] sm:$0xff]
          %v1505 = vld [vmem:[#allocation11 + $0x18] sm:$0xff]
          %v1506 = vld [vmem:[#allocation11 + $0x20] sm:$0xff]
          %v1507 = vld [vmem:[#allocation11 + $0x28] sm:$0xff]
          %v1508 = vld [vmem:[#allocation11 + $0x30] sm:$0xff]
          %v1509 = vld [vmem:[#allocation11 + $0x38] sm:$0xff]
          %v1510 = vld [vmem:[#allocation11 + $0x40] sm:$0xff]
          %v1511 = vld [vmem:[#allocation11 + $0x48] sm:$0xff]
          %v1512 = vld [vmem:[#allocation11 + $0x50] sm:$0xff]
          %v1513 = vld [vmem:[#allocation11 + $0x58] sm:$0xff]
          %v1514 = vld [vmem:[#allocation11 + $0x60] sm:$0xff]
          %v1515 = vld [vmem:[#allocation11 + $0x68] sm:$0xff]
          %v1516 = vld [vmem:[#allocation11 + $0x70] sm:$0xff]
          %v1517 = vld [vmem:[#allocation11 + $0x78] sm:$0xff]
          %v1518 = vld [vmem:[#allocation11 + $0x80] sm:$0xff]
          %v1519 = vld [vmem:[#allocation11 + $0x88] sm:$0xff]
          %v1520 = vld [vmem:[#allocation11 + $0x90] sm:$0xff]
          %v1521 = vld [vmem:[#allocation11 + $0x98] sm:$0xff]
          %v1522 = vld [vmem:[#allocation11 + $0xa0] sm:$0xff]
          %v1523 = vld [vmem:[#allocation11 + $0xa8] sm:$0xff]
          %v1524 = vld [vmem:[#allocation11 + $0xb0] sm:$0xff]
          %v1525 = vld [vmem:[#allocation11 + $0xb8] sm:$0xff]
          %v1526 = vld [vmem:[#allocation11 + $0xc0] sm:$0xff]
          %v1527 = vld [vmem:[#allocation11 + $0xc8] sm:$0xff]
          %v1528 = vld [vmem:[#allocation11 + $0xd0] sm:$0xff]
          %v1529 = vld [vmem:[#allocation11 + $0xd8] sm:$0xff]
          %v1530 = vld [vmem:[#allocation11 + $0xe0] sm:$0xff]
          %v1531 = vld [vmem:[#allocation11 + $0xe8] sm:$0xff]
          %v1532 = vld [vmem:[#allocation11 + $0xf0] sm:$0xff]
          %v1533 = vld [vmem:[#allocation11 + $0xf8] sm:$0xff]
          %v1534 = vld [vmem:[%s6] sm:$0xf]
          %v1536 = vlaneseq
          %v1537 = vshrl.u32 %v1536, 7
          %v1538 = vsub.s32 0, %v1537
          %v1539 = vrot.slane %v1534, %v1538
          %v1540 = vlaneseq
          %v1541 = vshrl.u32 %v1540, 7
          %v1542 = vsub.s32 1, %v1541
          %v1543 = vrot.slane %v1534, %v1542
          %v1544 = vlaneseq
          %v1545 = vshrl.u32 %v1544, 7
          %v1546 = vsub.s32 2, %v1545
          %v1547 = vrot.slane %v1534, %v1546
          %v1548 = vlaneseq
          %v1549 = vshrl.u32 %v1548, 7
          %v1550 = vsub.s32 3, %v1549
          %v1551 = vrot.slane %v1534, %v1550
          %v1588 = vunpack.c.l.b16 %v1502
          %v1589 = vunpack.c.h.b16 %v1502
          %v1590 = vunpack.c.l.b16 %v1503
          %v1591 = vunpack.c.h.b16 %v1503
          %v1592 = vunpack.c.l.b16 %v1504
          %v1593 = vunpack.c.h.b16 %v1504
          %v1594 = vunpack.c.l.b16 %v1505
          %v1595 = vunpack.c.h.b16 %v1505
          %v1596 = vunpack.c.l.b16 %v1506
          %v1597 = vunpack.c.h.b16 %v1506
          %v1598 = vunpack.c.l.b16 %v1507
          %v1599 = vunpack.c.h.b16 %v1507
          %v1600 = vunpack.c.l.b16 %v1508
          %v1601 = vunpack.c.h.b16 %v1508
          %v1602 = vunpack.c.l.b16 %v1509
          %v1603 = vunpack.c.h.b16 %v1509
          %v1604 = vunpack.c.l.b16 %v1510
          %v1605 = vunpack.c.h.b16 %v1510
          %v1606 = vunpack.c.l.b16 %v1511
          %v1607 = vunpack.c.h.b16 %v1511
          %v1608 = vunpack.c.l.b16 %v1512
          %v1609 = vunpack.c.h.b16 %v1512
          %v1610 = vunpack.c.l.b16 %v1513
          %v1611 = vunpack.c.h.b16 %v1513
          %v1612 = vunpack.c.l.b16 %v1514
          %v1613 = vunpack.c.h.b16 %v1514
          %v1614 = vunpack.c.l.b16 %v1515
          %v1615 = vunpack.c.h.b16 %v1515
          %v1616 = vunpack.c.l.b16 %v1516
          %v1617 = vunpack.c.h.b16 %v1516
          %v1618 = vunpack.c.l.b16 %v1517
          %v1619 = vunpack.c.h.b16 %v1517
          %v1620 = vunpack.c.l.b16 %v1518
          %v1621 = vunpack.c.h.b16 %v1518
          %v1622 = vunpack.c.l.b16 %v1519
          %v1623 = vunpack.c.h.b16 %v1519
          %v1624 = vunpack.c.l.b16 %v1520
          %v1625 = vunpack.c.h.b16 %v1520
          %v1626 = vunpack.c.l.b16 %v1521
          %v1627 = vunpack.c.h.b16 %v1521
          %v1628 = vunpack.c.l.b16 %v1522
          %v1629 = vunpack.c.h.b16 %v1522
          %v1630 = vunpack.c.l.b16 %v1523
          %v1631 = vunpack.c.h.b16 %v1523
          %v1632 = vunpack.c.l.b16 %v1524
          %v1633 = vunpack.c.h.b16 %v1524
          %v1634 = vunpack.c.l.b16 %v1525
          %v1635 = vunpack.c.h.b16 %v1525
          %v1636 = vunpack.c.l.b16 %v1526
          %v1637 = vunpack.c.h.b16 %v1526
          %v1638 = vunpack.c.l.b16 %v1527
          %v1639 = vunpack.c.h.b16 %v1527
          %v1640 = vunpack.c.l.b16 %v1528
          %v1641 = vunpack.c.h.b16 %v1528
          %v1642 = vunpack.c.l.b16 %v1529
          %v1643 = vunpack.c.h.b16 %v1529
          %v1644 = vunpack.c.l.b16 %v1530
          %v1645 = vunpack.c.h.b16 %v1530
          %v1646 = vunpack.c.l.b16 %v1531
          %v1647 = vunpack.c.h.b16 %v1531
          %v1648 = vunpack.c.l.b16 %v1532
          %v1649 = vunpack.c.h.b16 %v1532
          %v1650 = vunpack.c.l.b16 %v1533
          %v1651 = vunpack.c.h.b16 %v1533
          %v1652 = vpack.c.b16 %v1592, %v1588
          %v1653 = vpack.c.b16 %v1593, %v1589
          %v1654 = vpack.c.b16 %v1594, %v1590
          %v1655 = vpack.c.b16 %v1595, %v1591
          %v1656 = vpack.c.b16 %v1600, %v1596
          %v1657 = vpack.c.b16 %v1601, %v1597
          %v1658 = vpack.c.b16 %v1602, %v1598
          %v1659 = vpack.c.b16 %v1603, %v1599
          %v1660 = vpack.c.b16 %v1608, %v1604
          %v1661 = vpack.c.b16 %v1609, %v1605
          %v1662 = vpack.c.b16 %v1610, %v1606
          %v1663 = vpack.c.b16 %v1611, %v1607
          %v1664 = vpack.c.b16 %v1616, %v1612
          %v1665 = vpack.c.b16 %v1617, %v1613
          %v1666 = vpack.c.b16 %v1618, %v1614
          %v1667 = vpack.c.b16 %v1619, %v1615
          %v1668 = vpack.c.b16 %v1624, %v1620
          %v1669 = vpack.c.b16 %v1625, %v1621
          %v1670 = vpack.c.b16 %v1626, %v1622
          %v1671 = vpack.c.b16 %v1627, %v1623
          %v1672 = vpack.c.b16 %v1632, %v1628
          %v1673 = vpack.c.b16 %v1633, %v1629
          %v1674 = vpack.c.b16 %v1634, %v1630
          %v1675 = vpack.c.b16 %v1635, %v1631
          %v1676 = vpack.c.b16 %v1640, %v1636
          %v1677 = vpack.c.b16 %v1641, %v1637
          %v1678 = vpack.c.b16 %v1642, %v1638
          %v1679 = vpack.c.b16 %v1643, %v1639
          %v1680 = vpack.c.b16 %v1648, %v1644
          %v1681 = vpack.c.b16 %v1649, %v1645
          %v1682 = vpack.c.b16 %v1650, %v1646
          %v1683 = vpack.c.b16 %v1651, %v1647
          %1716 = vmatprep.subr.bf16.mxu0 %v1681
          %1717 = vmatpush1.bf16.msra.mxu0 %v1680
          %1718 = vmatprep.subr.bf16.mxu0 %v1677
          %1719 = vmatpush1.bf16.msra.mxu0 %v1676
          %1720 = vmatprep.subr.bf16.mxu0 %v1673
          %1721 = vmatpush1.bf16.msra.mxu0 %v1672
          %1722 = vmatprep.subr.bf16.mxu0 %v1669
          %1723 = vmatpush1.bf16.msra.mxu0 %v1668
          %1724 = vmatprep.subr.bf16.mxu0 %v1665
          %1725 = vmatpush1.bf16.msra.mxu0 %v1664
          %1726 = vmatprep.subr.bf16.mxu0 %v1661
          %1727 = vmatpush1.bf16.msra.mxu0 %v1660
          %1728 = vmatprep.subr.bf16.mxu0 %v1657
          %1729 = vmatpush1.bf16.msra.mxu0 %v1656
          %1730 = vmatprep.subr.bf16.mxu0 %v1653
          %1731 = vmatpush1.bf16.msra.mxu0 %v1652
          %1732 = vmatprep.subr.bf16.mxu0 0
          %1733 = vmatpush2.bf16.msra.mxu0 0
          %1734 = vmatprep.subr.bf16.mxu0 0
          %1735 = vmatpush2.bf16.msra.mxu0 0
          %1736 = vmatprep.subr.bf16.mxu0 0
          %1737 = vmatpush2.bf16.msra.mxu0 0
          %1738 = vmatprep.subr.bf16.mxu0 0
          %1739 = vmatpush2.bf16.msra.mxu0 0
          %1740 = vmatprep.subr.bf16.mxu0 0
          %1741 = vmatpush2.bf16.msra.mxu0 0
          %1742 = vmatprep.subr.bf16.mxu0 0
          %1743 = vmatpush2.bf16.msra.mxu0 0
          %1744 = vmatprep.subr.bf16.mxu0 0
          %1745 = vmatpush2.bf16.msra.mxu0 0
          %1746 = vmatprep.subr.bf16.mxu0 0
          %1747 = vmatpush2.bf16.msra.mxu0 0
          %1748 = vmatprep.mubr.bf16.mxu0 0
          %1749 = vmatmul.mubr.bf16.gmra.mxu0 %v1498
          %v1750 = vpop.f32.mrf.mxu0
          %v1751 = vadd.f32 %v1539, %v1750
          %v1752 = vpop.f32.mrf.mxu0
          %v1753 = vadd.f32 %v1543, %v1752
          %v1754 = vpop.f32.mrf.mxu0
          %v1755 = vadd.f32 %v1539, %v1754
          %v1756 = vpop.f32.mrf.mxu0
          %v1757 = vadd.f32 %v1543, %v1756
          %1758 = vmatprep.mubr.bf16.mxu0 0
          %1759 = vmatmul.mubr.bf16.gmra.mxu0 %v1499
          %v1760 = vpop.f32.mrf.mxu0
          %v1761 = vadd.f32 %v1539, %v1760
          %v1762 = vpop.f32.mrf.mxu0
          %v1763 = vadd.f32 %v1543, %v1762
          %v1764 = vpop.f32.mrf.mxu0
          %v1765 = vadd.f32 %v1539, %v1764
          %v1766 = vpop.f32.mrf.mxu0
          %v1767 = vadd.f32 %v1543, %v1766
          %1768 = vmatprep.mubr.bf16.mxu0 0
          %1769 = vmatmul.mubr.bf16.gmra.mxu0 %v1500
          %v1770 = vpop.f32.mrf.mxu0
          %v1771 = vadd.f32 %v1539, %v1770
          %v1772 = vpop.f32.mrf.mxu0
          %v1773 = vadd.f32 %v1543, %v1772
          %v1774 = vpop.f32.mrf.mxu0
          %v1775 = vadd.f32 %v1539, %v1774
          %v1776 = vpop.f32.mrf.mxu0
          %v1777 = vadd.f32 %v1543, %v1776
          %1778 = vmatprep.mubr.bf16.mxu0 0
          %1779 = vmatmul.mubr.bf16.gmra.mxu0 %v1501
          %v1780 = vpop.f32.mrf.mxu0
          %v1781 = vadd.f32 %v1539, %v1780
          %v1782 = vpop.f32.mrf.mxu0
          %v1783 = vadd.f32 %v1543, %v1782
          %v1784 = vpop.f32.mrf.mxu0
          %v1785 = vadd.f32 %v1539, %v1784
          %v1786 = vpop.f32.mrf.mxu0
          %v1787 = vadd.f32 %v1543, %v1786
          %1788 = vdwg.mxu0
          %1789 = vmatprep.subr.bf16.mxu0 %v1683
          %1790 = vmatpush1.bf16.msra.mxu0 %v1682
          %1791 = vmatprep.subr.bf16.mxu0 %v1679
          %1792 = vmatpush1.bf16.msra.mxu0 %v1678
          %1793 = vmatprep.subr.bf16.mxu0 %v1675
          %1794 = vmatpush1.bf16.msra.mxu0 %v1674
          %1795 = vmatprep.subr.bf16.mxu0 %v1671
          %1796 = vmatpush1.bf16.msra.mxu0 %v1670
          %1797 = vmatprep.subr.bf16.mxu0 %v1667
          %1798 = vmatpush1.bf16.msra.mxu0 %v1666
          %1799 = vmatprep.subr.bf16.mxu0 %v1663
          %1800 = vmatpush1.bf16.msra.mxu0 %v1662
          %1801 = vmatprep.subr.bf16.mxu0 %v1659
          %1802 = vmatpush1.bf16.msra.mxu0 %v1658
          %1803 = vmatprep.subr.bf16.mxu0 %v1655
          %1804 = vmatpush1.bf16.msra.mxu0 %v1654
          %1805 = vmatprep.subr.bf16.mxu0 0
          %1806 = vmatpush2.bf16.msra.mxu0 0
          %1807 = vmatprep.subr.bf16.mxu0 0
          %1808 = vmatpush2.bf16.msra.mxu0 0
          %1809 = vmatprep.subr.bf16.mxu0 0
          %1810 = vmatpush2.bf16.msra.mxu0 0
          %1811 = vmatprep.subr.bf16.mxu0 0
          %1812 = vmatpush2.bf16.msra.mxu0 0
          %1813 = vmatprep.subr.bf16.mxu0 0
          %1814 = vmatpush2.bf16.msra.mxu0 0
          %1815 = vmatprep.subr.bf16.mxu0 0
          %1816 = vmatpush2.bf16.msra.mxu0 0
          %1817 = vmatprep.subr.bf16.mxu0 0
          %1818 = vmatpush2.bf16.msra.mxu0 0
          %1819 = vmatprep.subr.bf16.mxu0 0
          %1820 = vmatpush2.bf16.msra.mxu0 0
          %1821 = vmatprep.mubr.bf16.mxu0 0
          %1822 = vmatmul.mubr.bf16.gmra.mxu0 %v1498
          %v1823 = vpop.f32.mrf.mxu0
          %v1824 = vadd.f32 %v1547, %v1823
          %v1825 = vpop.f32.mrf.mxu0
          %v1826 = vadd.f32 %v1551, %v1825
          %v1827 = vpop.f32.mrf.mxu0
          %v1828 = vadd.f32 %v1547, %v1827
          %v1829 = vpop.f32.mrf.mxu0
          %v1830 = vadd.f32 %v1551, %v1829
          %1831 = vmatprep.mubr.bf16.mxu0 0
          %1832 = vmatmul.mubr.bf16.gmra.mxu0 %v1499
          %v1833 = vpop.f32.mrf.mxu0
          %v1834 = vadd.f32 %v1547, %v1833
          %v1835 = vpop.f32.mrf.mxu0
          %v1836 = vadd.f32 %v1551, %v1835
          %v1837 = vpop.f32.mrf.mxu0
          %v1838 = vadd.f32 %v1547, %v1837
          %v1839 = vpop.f32.mrf.mxu0
          %v1840 = vadd.f32 %v1551, %v1839
          %1841 = vmatprep.mubr.bf16.mxu0 0
          %1842 = vmatmul.mubr.bf16.gmra.mxu0 %v1500
          %v1843 = vpop.f32.mrf.mxu0
          %v1844 = vadd.f32 %v1547, %v1843
          %v1845 = vpop.f32.mrf.mxu0
          %v1846 = vadd.f32 %v1551, %v1845
          %v1847 = vpop.f32.mrf.mxu0
          %v1848 = vadd.f32 %v1547, %v1847
          %v1849 = vpop.f32.mrf.mxu0
          %v1850 = vadd.f32 %v1551, %v1849
          %1851 = vmatprep.mubr.bf16.mxu0 0
          %1852 = vmatmul.mubr.bf16.gmra.mxu0 %v1501
          %v1853 = vpop.f32.mrf.mxu0
          %v1854 = vadd.f32 %v1547, %v1853
          %v1855 = vpop.f32.mrf.mxu0
          %v1856 = vadd.f32 %v1551, %v1855
          %v1857 = vpop.f32.mrf.mxu0
          %v1858 = vadd.f32 %v1547, %v1857
          %v1859 = vpop.f32.mrf.mxu0
          %v1860 = vadd.f32 %v1551, %v1859
          %1861 = vdwg.mxu0
          %v1862 = vmax.f32 %v1751, 0.0
          %v1863 = vmax.f32 %v1753, 0.0
          %v1864 = vmax.f32 %v1824, 0.0
          %v1865 = vmax.f32 %v1826, 0.0
          %v1866 = vmax.f32 %v1755, 0.0
          %v1867 = vmax.f32 %v1757, 0.0
          %v1868 = vmax.f32 %v1828, 0.0
          %v1869 = vmax.f32 %v1830, 0.0
          %v1870 = vmax.f32 %v1761, 0.0
          %v1871 = vmax.f32 %v1763, 0.0
          %v1872 = vmax.f32 %v1834, 0.0
          %v1873 = vmax.f32 %v1836, 0.0
          %v1874 = vmax.f32 %v1765, 0.0
          %v1875 = vmax.f32 %v1767, 0.0
          %v1876 = vmax.f32 %v1838, 0.0
          %v1877 = vmax.f32 %v1840, 0.0
          %v1878 = vmax.f32 %v1771, 0.0
          %v1879 = vmax.f32 %v1773, 0.0
          %v1880 = vmax.f32 %v1844, 0.0
          %v1881 = vmax.f32 %v1846, 0.0
          %v1882 = vmax.f32 %v1775, 0.0
          %v1883 = vmax.f32 %v1777, 0.0
          %v1884 = vmax.f32 %v1848, 0.0
          %v1885 = vmax.f32 %v1850, 0.0
          %v1886 = vmax.f32 %v1781, 0.0
          %v1887 = vmax.f32 %v1783, 0.0
          %v1888 = vmax.f32 %v1854, 0.0
          %v1889 = vmax.f32 %v1856, 0.0
          %v1890 = vmax.f32 %v1785, 0.0
          %v1891 = vmax.f32 %v1787, 0.0
          %v1892 = vmax.f32 %v1858, 0.0
          %v1893 = vmax.f32 %v1860, 0.0
          %v1894 = vpack.c.bf16 %v1866, %v1862
          %v1895 = vpack.c.bf16 %v1867, %v1863
          %v1896 = vpack.c.bf16 %v1868, %v1864
          %v1897 = vpack.c.bf16 %v1869, %v1865
          %v1898 = vpack.c.bf16 %v1874, %v1870
          %v1899 = vpack.c.bf16 %v1875, %v1871
          %v1900 = vpack.c.bf16 %v1876, %v1872
          %v1901 = vpack.c.bf16 %v1877, %v1873
          %v1902 = vpack.c.bf16 %v1882, %v1878
          %v1903 = vpack.c.bf16 %v1883, %v1879
          %v1904 = vpack.c.bf16 %v1884, %v1880
          %v1905 = vpack.c.bf16 %v1885, %v1881
          %v1906 = vpack.c.bf16 %v1890, %v1886
          %v1907 = vpack.c.bf16 %v1891, %v1887
          %v1908 = vpack.c.bf16 %v1892, %v1888
          %v1909 = vpack.c.bf16 %v1893, %v1889
          %v1926 = vunpack.c.l.b16 %v1894
          %v1927 = vunpack.c.l.b16 %v1895
          %v1928 = vunpack.c.l.b16 %v1896
          %v1929 = vunpack.c.l.b16 %v1897
          %v1930 = vunpack.c.h.b16 %v1894
          %v1931 = vunpack.c.h.b16 %v1895
          %v1932 = vunpack.c.h.b16 %v1896
          %v1933 = vunpack.c.h.b16 %v1897
          %v1934 = vunpack.c.l.b16 %v1898
          %v1935 = vunpack.c.l.b16 %v1899
          %v1936 = vunpack.c.l.b16 %v1900
          %v1937 = vunpack.c.l.b16 %v1901
          %v1938 = vunpack.c.h.b16 %v1898
          %v1939 = vunpack.c.h.b16 %v1899
          %v1940 = vunpack.c.h.b16 %v1900
          %v1941 = vunpack.c.h.b16 %v1901
          %v1942 = vunpack.c.l.b16 %v1902
          %v1943 = vunpack.c.l.b16 %v1903
          %v1944 = vunpack.c.l.b16 %v1904
          %v1945 = vunpack.c.l.b16 %v1905
          %v1946 = vunpack.c.h.b16 %v1902
          %v1947 = vunpack.c.h.b16 %v1903
          %v1948 = vunpack.c.h.b16 %v1904
          %v1949 = vunpack.c.h.b16 %v1905
          %v1950 = vunpack.c.l.b16 %v1906
          %v1951 = vunpack.c.l.b16 %v1907
          %v1952 = vunpack.c.l.b16 %v1908
          %v1953 = vunpack.c.l.b16 %v1909
          %v1954 = vunpack.c.h.b16 %v1906
          %v1955 = vunpack.c.h.b16 %v1907
          %v1956 = vunpack.c.h.b16 %v1908
          %v1957 = vunpack.c.h.b16 %v1909
          %v1958 = vpack.c.b16 %v1927, %v1926
          %v1959 = vpack.c.b16 %v1929, %v1928
          %v1960 = vpack.c.b16 %v1931, %v1930
          %v1961 = vpack.c.b16 %v1933, %v1932
          %v1962 = vpack.c.b16 %v1935, %v1934
          %v1963 = vpack.c.b16 %v1937, %v1936
          %v1964 = vpack.c.b16 %v1939, %v1938
          %v1965 = vpack.c.b16 %v1941, %v1940
          %v1966 = vpack.c.b16 %v1943, %v1942
          %v1967 = vpack.c.b16 %v1945, %v1944
          %v1968 = vpack.c.b16 %v1947, %v1946
          %v1969 = vpack.c.b16 %v1949, %v1948
          %v1970 = vpack.c.b16 %v1951, %v1950
          %v1971 = vpack.c.b16 %v1953, %v1952
          %v1972 = vpack.c.b16 %v1955, %v1954
          %v1973 = vpack.c.b16 %v1957, %v1956
          %1990 = vst [vmem:[#allocation2] sm:$0xff] %v1958
          %1991 = vst [vmem:[#allocation2 + $0x8] sm:$0xff] %v1959
          %1992 = vst [vmem:[#allocation2 + $0x10] sm:$0xff] %v1960
          %1993 = vst [vmem:[#allocation2 + $0x18] sm:$0xff] %v1961
          %1994 = vst [vmem:[#allocation2 + $0x20] sm:$0xff] %v1962
          %1995 = vst [vmem:[#allocation2 + $0x28] sm:$0xff] %v1963
          %1996 = vst [vmem:[#allocation2 + $0x30] sm:$0xff] %v1964
          %1997 = vst [vmem:[#allocation2 + $0x38] sm:$0xff] %v1965
          %1998 = vst [vmem:[#allocation2 + $0x40] sm:$0xff] %v1966
          %1999 = vst [vmem:[#allocation2 + $0x48] sm:$0xff] %v1967
          %2000 = vst [vmem:[#allocation2 + $0x50] sm:$0xff] %v1968
          %2001 = vst [vmem:[#allocation2 + $0x58] sm:$0xff] %v1969
          %2002 = vst [vmem:[#allocation2 + $0x60] sm:$0xff] %v1970
          %2003 = vst [vmem:[#allocation2 + $0x68] sm:$0xff] %v1971
          %2004 = vst [vmem:[#allocation2 + $0x70] sm:$0xff] %v1972
          %2005 = vst [vmem:[#allocation2 + $0x78] sm:$0xff] %v1973
        $region84: #{tpu_custom_call.1} parent=55 // pred_fallthru
          _
        %v2006 = vld [vmem:[#allocation2] sm:$0xff]
        %v2007 = vld [vmem:[#allocation2 + $0x8] sm:$0xff]
        %v2008 = vld [vmem:[#allocation2 + $0x10] sm:$0xff]
        %v2009 = vld [vmem:[#allocation2 + $0x18] sm:$0xff]
        %v2010 = vld [vmem:[#allocation2 + $0x20] sm:$0xff]
        %v2011 = vld [vmem:[#allocation2 + $0x28] sm:$0xff]
        %v2012 = vld [vmem:[#allocation2 + $0x30] sm:$0xff]
        %v2013 = vld [vmem:[#allocation2 + $0x38] sm:$0xff]
        %v2014 = vld [vmem:[#allocation2 + $0x40] sm:$0xff]
        %v2015 = vld [vmem:[#allocation2 + $0x48] sm:$0xff]
        %v2016 = vld [vmem:[#allocation2 + $0x50] sm:$0xff]
        %v2017 = vld [vmem:[#allocation2 + $0x58] sm:$0xff]
        %v2018 = vld [vmem:[#allocation2 + $0x60] sm:$0xff]
        %v2019 = vld [vmem:[#allocation2 + $0x68] sm:$0xff]
        %v2020 = vld [vmem:[#allocation2 + $0x70] sm:$0xff]
        %v2021 = vld [vmem:[#allocation2 + $0x78] sm:$0xff]
        %v2022 = vld [vmem:[#allocation12] sm:$0xff]
        %v2023 = vld [vmem:[#allocation12 + $0x8] sm:$0xff]
        %v2024 = vld [vmem:[#allocation12 + $0x10] sm:$0xff]
        %v2025 = vld [vmem:[#allocation12 + $0x18] sm:$0xff]
        %v2026 = vld [vmem:[#allocation12 + $0x20] sm:$0xff]
        %v2027 = vld [vmem:[#allocation12 + $0x28] sm:$0xff]
        %v2028 = vld [vmem:[#allocation12 + $0x30] sm:$0xff]
        %v2029 = vld [vmem:[#allocation12 + $0x38] sm:$0xff]
        %v2030 = vld [vmem:[#allocation12 + $0x40] sm:$0xff]
        %v2031 = vld [vmem:[#allocation12 + $0x48] sm:$0xff]
        %v2032 = vld [vmem:[#allocation12 + $0x50] sm:$0xff]
        %v2033 = vld [vmem:[#allocation12 + $0x58] sm:$0xff]
        %v2034 = vld [vmem:[#allocation12 + $0x60] sm:$0xff]
        %v2035 = vld [vmem:[#allocation12 + $0x68] sm:$0xff]
        %v2036 = vld [vmem:[#allocation12 + $0x70] sm:$0xff]
        %v2037 = vld [vmem:[#allocation12 + $0x78] sm:$0xff]
        %v2038 = vld [vmem:[#allocation12 + $0x80] sm:$0xff]
        %v2039 = vld [vmem:[#allocation12 + $0x88] sm:$0xff]
        %v2040 = vld [vmem:[#allocation12 + $0x90] sm:$0xff]
        %v2041 = vld [vmem:[#allocation12 + $0x98] sm:$0xff]
        %v2042 = vld [vmem:[#allocation12 + $0xa0] sm:$0xff]
        %v2043 = vld [vmem:[#allocation12 + $0xa8] sm:$0xff]
        %v2044 = vld [vmem:[#allocation12 + $0xb0] sm:$0xff]
        %v2045 = vld [vmem:[#allocation12 + $0xb8] sm:$0xff]
        %v2046 = vld [vmem:[#allocation12 + $0xc0] sm:$0xff]
        %v2047 = vld [vmem:[#allocation12 + $0xc8] sm:$0xff]
        %v2048 = vld [vmem:[#allocation12 + $0xd0] sm:$0xff]
        %v2049 = vld [vmem:[#allocation12 + $0xd8] sm:$0xff]
        %v2050 = vld [vmem:[#allocation12 + $0xe0] sm:$0xff]
        %v2051 = vld [vmem:[#allocation12 + $0xe8] sm:$0xff]
        %v2052 = vld [vmem:[#allocation12 + $0xf0] sm:$0xff]
        %v2053 = vld [vmem:[#allocation12 + $0xf8] sm:$0xff]
        %v2054 = vld [vmem:[#allocation12 + $0x100] sm:$0xff]
        %v2055 = vld [vmem:[#allocation12 + $0x108] sm:$0xff]
        %v2056 = vld [vmem:[#allocation12 + $0x110] sm:$0xff]
        %v2057 = vld [vmem:[#allocation12 + $0x118] sm:$0xff]
        %v2058 = vld [vmem:[#allocation12 + $0x120] sm:$0xff]
        %v2059 = vld [vmem:[#allocation12 + $0x128] sm:$0xff]
        %v2060 = vld [vmem:[#allocation12 + $0x130] sm:$0xff]
        %v2061 = vld [vmem:[#allocation12 + $0x138] sm:$0xff]
        %v2062 = vld [vmem:[#allocation12 + $0x140] sm:$0xff]
        %v2063 = vld [vmem:[#allocation12 + $0x148] sm:$0xff]
        %v2064 = vld [vmem:[#allocation12 + $0x150] sm:$0xff]
        %v2065 = vld [vmem:[#allocation12 + $0x158] sm:$0xff]
        %v2066 = vld [vmem:[#allocation12 + $0x160] sm:$0xff]
        %v2067 = vld [vmem:[#allocation12 + $0x168] sm:$0xff]
        %v2068 = vld [vmem:[#allocation12 + $0x170] sm:$0xff]
        %v2069 = vld [vmem:[#allocation12 + $0x178] sm:$0xff]
        %v2070 = vld [vmem:[#allocation12 + $0x180] sm:$0xff]
        %v2071 = vld [vmem:[#allocation12 + $0x188] sm:$0xff]
        %v2072 = vld [vmem:[#allocation12 + $0x190] sm:$0xff]
        %v2073 = vld [vmem:[#allocation12 + $0x198] sm:$0xff]
        %v2074 = vld [vmem:[#allocation12 + $0x1a0] sm:$0xff]
        %v2075 = vld [vmem:[#allocation12 + $0x1a8] sm:$0xff]
        %v2076 = vld [vmem:[#allocation12 + $0x1b0] sm:$0xff]
        %v2077 = vld [vmem:[#allocation12 + $0x1b8] sm:$0xff]
        %v2078 = vld [vmem:[#allocation12 + $0x1c0] sm:$0xff]
        %v2079 = vld [vmem:[#allocation12 + $0x1c8] sm:$0xff]
        %v2080 = vld [vmem:[#allocation12 + $0x1d0] sm:$0xff]
        %v2081 = vld [vmem:[#allocation12 + $0x1d8] sm:$0xff]
        %v2082 = vld [vmem:[#allocation12 + $0x1e0] sm:$0xff]
        %v2083 = vld [vmem:[#allocation12 + $0x1e8] sm:$0xff]
        %v2084 = vld [vmem:[#allocation12 + $0x1f0] sm:$0xff]
        %v2085 = vld [vmem:[#allocation12 + $0x1f8] sm:$0xff]
        %v2086 = vld [vmem:[%s464] sm:$0x3]
        %v2088 = vlaneseq
        %v2089 = vshrl.u32 %v2088, 7
        %v2090 = vsub.s32 0, %v2089
        %v2091 = vrot.slane %v2086, %v2090
        %v2092 = vlaneseq
        %v2093 = vshrl.u32 %v2092, 7
        %v2094 = vsub.s32 1, %v2093
        %v2095 = vrot.slane %v2086, %v2094
        %v2114 = vunpack.c.l.b16 %v2006
        %v2115 = vunpack.c.h.b16 %v2006
        %v2116 = vunpack.c.l.b16 %v2007
        %v2117 = vunpack.c.h.b16 %v2007
        %v2118 = vunpack.c.l.b16 %v2008
        %v2119 = vunpack.c.h.b16 %v2008
        %v2120 = vunpack.c.l.b16 %v2009
        %v2121 = vunpack.c.h.b16 %v2009
        %v2122 = vunpack.c.l.b16 %v2010
        %v2123 = vunpack.c.h.b16 %v2010
        %v2124 = vunpack.c.l.b16 %v2011
        %v2125 = vunpack.c.h.b16 %v2011
        %v2126 = vunpack.c.l.b16 %v2012
        %v2127 = vunpack.c.h.b16 %v2012
        %v2128 = vunpack.c.l.b16 %v2013
        %v2129 = vunpack.c.h.b16 %v2013
        %v2130 = vunpack.c.l.b16 %v2014
        %v2131 = vunpack.c.h.b16 %v2014
        %v2132 = vunpack.c.l.b16 %v2015
        %v2133 = vunpack.c.h.b16 %v2015
        %v2134 = vunpack.c.l.b16 %v2016
        %v2135 = vunpack.c.h.b16 %v2016
        %v2136 = vunpack.c.l.b16 %v2017
        %v2137 = vunpack.c.h.b16 %v2017
        %v2138 = vunpack.c.l.b16 %v2018
        %v2139 = vunpack.c.h.b16 %v2018
        %v2140 = vunpack.c.l.b16 %v2019
        %v2141 = vunpack.c.h.b16 %v2019
        %v2142 = vunpack.c.l.b16 %v2020
        %v2143 = vunpack.c.h.b16 %v2020
        %v2144 = vunpack.c.l.b16 %v2021
        %v2145 = vunpack.c.h.b16 %v2021
        %v2146 = vpack.c.b16 %v2118, %v2114
        %v2147 = vpack.c.b16 %v2119, %v2115
        %v2148 = vpack.c.b16 %v2120, %v2116
        %v2149 = vpack.c.b16 %v2121, %v2117
        %v2150 = vpack.c.b16 %v2126, %v2122
        %v2151 = vpack.c.b16 %v2127, %v2123
        %v2152 = vpack.c.b16 %v2128, %v2124
        %v2153 = vpack.c.b16 %v2129, %v2125
        %v2154 = vpack.c.b16 %v2134, %v2130
        %v2155 = vpack.c.b16 %v2135, %v2131
        %v2156 = vpack.c.b16 %v2136, %v2132
        %v2157 = vpack.c.b16 %v2137, %v2133
        %v2158 = vpack.c.b16 %v2142, %v2138
        %v2159 = vpack.c.b16 %v2143, %v2139
        %v2160 = vpack.c.b16 %v2144, %v2140
        %v2161 = vpack.c.b16 %v2145, %v2141
        %v2242 = vunpack.c.l.b16 %v2022
        %v2243 = vunpack.c.h.b16 %v2022
        %v2244 = vunpack.c.l.b16 %v2023
        %v2245 = vunpack.c.h.b16 %v2023
        %v2246 = vunpack.c.l.b16 %v2024
        %v2247 = vunpack.c.h.b16 %v2024
        %v2248 = vunpack.c.l.b16 %v2025
        %v2249 = vunpack.c.h.b16 %v2025
        %v2250 = vunpack.c.l.b16 %v2026
        %v2251 = vunpack.c.h.b16 %v2026
        %v2252 = vunpack.c.l.b16 %v2027
        %v2253 = vunpack.c.h.b16 %v2027
        %v2254 = vunpack.c.l.b16 %v2028
        %v2255 = vunpack.c.h.b16 %v2028
        %v2256 = vunpack.c.l.b16 %v2029
        %v2257 = vunpack.c.h.b16 %v2029
        %v2258 = vunpack.c.l.b16 %v2030
        %v2259 = vunpack.c.h.b16 %v2030
        %v2260 = vunpack.c.l.b16 %v2031
        %v2261 = vunpack.c.h.b16 %v2031
        %v2262 = vunpack.c.l.b16 %v2032
        %v2263 = vunpack.c.h.b16 %v2032
        %v2264 = vunpack.c.l.b16 %v2033
        %v2265 = vunpack.c.h.b16 %v2033
        %v2266 = vunpack.c.l.b16 %v2034
        %v2267 = vunpack.c.h.b16 %v2034
        %v2268 = vunpack.c.l.b16 %v2035
        %v2269 = vunpack.c.h.b16 %v2035
        %v2270 = vunpack.c.l.b16 %v2036
        %v2271 = vunpack.c.h.b16 %v2036
        %v2272 = vunpack.c.l.b16 %v2037
        %v2273 = vunpack.c.h.b16 %v2037
        %v2274 = vunpack.c.l.b16 %v2038
        %v2275 = vunpack.c.h.b16 %v2038
        %v2276 = vunpack.c.l.b16 %v2039
        %v2277 = vunpack.c.h.b16 %v2039
        %v2278 = vunpack.c.l.b16 %v2040
        %v2279 = vunpack.c.h.b16 %v2040
        %v2280 = vunpack.c.l.b16 %v2041
        %v2281 = vunpack.c.h.b16 %v2041
        %v2282 = vunpack.c.l.b16 %v2042
        %v2283 = vunpack.c.h.b16 %v2042
        %v2284 = vunpack.c.l.b16 %v2043
        %v2285 = vunpack.c.h.b16 %v2043
        %v2286 = vunpack.c.l.b16 %v2044
        %v2287 = vunpack.c.h.b16 %v2044
        %v2288 = vunpack.c.l.b16 %v2045
        %v2289 = vunpack.c.h.b16 %v2045
        %v2290 = vunpack.c.l.b16 %v2046
        %v2291 = vunpack.c.h.b16 %v2046
        %v2292 = vunpack.c.l.b16 %v2047
        %v2293 = vunpack.c.h.b16 %v2047
        %v2294 = vunpack.c.l.b16 %v2048
        %v2295 = vunpack.c.h.b16 %v2048
        %v2296 = vunpack.c.l.b16 %v2049
        %v2297 = vunpack.c.h.b16 %v2049
        %v2298 = vunpack.c.l.b16 %v2050
        %v2299 = vunpack.c.h.b16 %v2050
        %v2300 = vunpack.c.l.b16 %v2051
        %v2301 = vunpack.c.h.b16 %v2051
        %v2302 = vunpack.c.l.b16 %v2052
        %v2303 = vunpack.c.h.b16 %v2052
        %v2304 = vunpack.c.l.b16 %v2053
        %v2305 = vunpack.c.h.b16 %v2053
        %v2306 = vunpack.c.l.b16 %v2054
        %v2307 = vunpack.c.h.b16 %v2054
        %v2308 = vunpack.c.l.b16 %v2055
        %v2309 = vunpack.c.h.b16 %v2055
        %v2310 = vunpack.c.l.b16 %v2056
        %v2311 = vunpack.c.h.b16 %v2056
        %v2312 = vunpack.c.l.b16 %v2057
        %v2313 = vunpack.c.h.b16 %v2057
        %v2314 = vunpack.c.l.b16 %v2058
        %v2315 = vunpack.c.h.b16 %v2058
        %v2316 = vunpack.c.l.b16 %v2059
        %v2317 = vunpack.c.h.b16 %v2059
        %v2318 = vunpack.c.l.b16 %v2060
        %v2319 = vunpack.c.h.b16 %v2060
        %v2320 = vunpack.c.l.b16 %v2061
        %v2321 = vunpack.c.h.b16 %v2061
        %v2322 = vunpack.c.l.b16 %v2062
        %v2323 = vunpack.c.h.b16 %v2062
        %v2324 = vunpack.c.l.b16 %v2063
        %v2325 = vunpack.c.h.b16 %v2063
        %v2326 = vunpack.c.l.b16 %v2064
        %v2327 = vunpack.c.h.b16 %v2064
        %v2328 = vunpack.c.l.b16 %v2065
        %v2329 = vunpack.c.h.b16 %v2065
        %v2330 = vunpack.c.l.b16 %v2066
        %v2331 = vunpack.c.h.b16 %v2066
        %v2332 = vunpack.c.l.b16 %v2067
        %v2333 = vunpack.c.h.b16 %v2067
        %v2334 = vunpack.c.l.b16 %v2068
        %v2335 = vunpack.c.h.b16 %v2068
        %v2336 = vunpack.c.l.b16 %v2069
        %v2337 = vunpack.c.h.b16 %v2069
        %v2338 = vunpack.c.l.b16 %v2070
        %v2339 = vunpack.c.h.b16 %v2070
        %v2340 = vunpack.c.l.b16 %v2071
        %v2341 = vunpack.c.h.b16 %v2071
        %v2342 = vunpack.c.l.b16 %v2072
        %v2343 = vunpack.c.h.b16 %v2072
        %v2344 = vunpack.c.l.b16 %v2073
        %v2345 = vunpack.c.h.b16 %v2073
        %v2346 = vunpack.c.l.b16 %v2074
        %v2347 = vunpack.c.h.b16 %v2074
        %v2348 = vunpack.c.l.b16 %v2075
        %v2349 = vunpack.c.h.b16 %v2075
        %v2350 = vunpack.c.l.b16 %v2076
        %v2351 = vunpack.c.h.b16 %v2076
        %v2352 = vunpack.c.l.b16 %v2077
        %v2353 = vunpack.c.h.b16 %v2077
        %v2354 = vunpack.c.l.b16 %v2078
        %v2355 = vunpack.c.h.b16 %v2078
        %v2356 = vunpack.c.l.b16 %v2079
        %v2357 = vunpack.c.h.b16 %v2079
        %v2358 = vunpack.c.l.b16 %v2080
        %v2359 = vunpack.c.h.b16 %v2080
        %v2360 = vunpack.c.l.b16 %v2081
        %v2361 = vunpack.c.h.b16 %v2081
        %v2362 = vunpack.c.l.b16 %v2082
        %v2363 = vunpack.c.h.b16 %v2082
        %v2364 = vunpack.c.l.b16 %v2083
        %v2365 = vunpack.c.h.b16 %v2083
        %v2366 = vunpack.c.l.b16 %v2084
        %v2367 = vunpack.c.h.b16 %v2084
        %v2368 = vunpack.c.l.b16 %v2085
        %v2369 = vunpack.c.h.b16 %v2085
        %v2370 = vpack.c.b16 %v2244, %v2242
        %v2371 = vpack.c.b16 %v2245, %v2243
        %v2372 = vpack.c.b16 %v2248, %v2246
        %v2373 = vpack.c.b16 %v2249, %v2247
        %v2374 = vpack.c.b16 %v2252, %v2250
        %v2375 = vpack.c.b16 %v2253, %v2251
        %v2376 = vpack.c.b16 %v2256, %v2254
        %v2377 = vpack.c.b16 %v2257, %v2255
        %v2378 = vpack.c.b16 %v2260, %v2258
        %v2379 = vpack.c.b16 %v2261, %v2259
        %v2380 = vpack.c.b16 %v2264, %v2262
        %v2381 = vpack.c.b16 %v2265, %v2263
        %v2382 = vpack.c.b16 %v2268, %v2266
        %v2383 = vpack.c.b16 %v2269, %v2267
        %v2384 = vpack.c.b16 %v2272, %v2270
        %v2385 = vpack.c.b16 %v2273, %v2271
        %v2386 = vpack.c.b16 %v2276, %v2274
        %v2387 = vpack.c.b16 %v2277, %v2275
        %v2388 = vpack.c.b16 %v2280, %v2278
        %v2389 = vpack.c.b16 %v2281, %v2279
        %v2390 = vpack.c.b16 %v2284, %v2282
        %v2391 = vpack.c.b16 %v2285, %v2283
        %v2392 = vpack.c.b16 %v2288, %v2286
        %v2393 = vpack.c.b16 %v2289, %v2287
        %v2394 = vpack.c.b16 %v2292, %v2290
        %v2395 = vpack.c.b16 %v2293, %v2291
        %v2396 = vpack.c.b16 %v2296, %v2294
        %v2397 = vpack.c.b16 %v2297, %v2295
        %v2398 = vpack.c.b16 %v2300, %v2298
        %v2399 = vpack.c.b16 %v2301, %v2299
        %v2400 = vpack.c.b16 %v2304, %v2302
        %v2401 = vpack.c.b16 %v2305, %v2303
        %v2402 = vpack.c.b16 %v2308, %v2306
        %v2403 = vpack.c.b16 %v2309, %v2307
        %v2404 = vpack.c.b16 %v2312, %v2310
        %v2405 = vpack.c.b16 %v2313, %v2311
        %v2406 = vpack.c.b16 %v2316, %v2314
        %v2407 = vpack.c.b16 %v2317, %v2315
        %v2408 = vpack.c.b16 %v2320, %v2318
        %v2409 = vpack.c.b16 %v2321, %v2319
        %v2410 = vpack.c.b16 %v2324, %v2322
        %v2411 = vpack.c.b16 %v2325, %v2323
        %v2412 = vpack.c.b16 %v2328, %v2326
        %v2413 = vpack.c.b16 %v2329, %v2327
        %v2414 = vpack.c.b16 %v2332, %v2330
        %v2415 = vpack.c.b16 %v2333, %v2331
        %v2416 = vpack.c.b16 %v2336, %v2334
        %v2417 = vpack.c.b16 %v2337, %v2335
        %v2418 = vpack.c.b16 %v2340, %v2338
        %v2419 = vpack.c.b16 %v2341, %v2339
        %v2420 = vpack.c.b16 %v2344, %v2342
        %v2421 = vpack.c.b16 %v2345, %v2343
        %v2422 = vpack.c.b16 %v2348, %v2346
        %v2423 = vpack.c.b16 %v2349, %v2347
        %v2424 = vpack.c.b16 %v2352, %v2350
        %v2425 = vpack.c.b16 %v2353, %v2351
        %v2426 = vpack.c.b16 %v2356, %v2354
        %v2427 = vpack.c.b16 %v2357, %v2355
        %v2428 = vpack.c.b16 %v2360, %v2358
        %v2429 = vpack.c.b16 %v2361, %v2359
        %v2430 = vpack.c.b16 %v2364, %v2362
        %v2431 = vpack.c.b16 %v2365, %v2363
        %v2432 = vpack.c.b16 %v2368, %v2366
        %v2433 = vpack.c.b16 %v2369, %v2367
        %2498 = vmatprep.subr.bf16.mxu0 %v2385
        %2499 = vmatpush1.bf16.msra.mxu0 %v2384
        %2500 = vmatprep.subr.bf16.mxu0 %v2383
        %2501 = vmatpush1.bf16.msra.mxu0 %v2382
        %2502 = vmatprep.subr.bf16.mxu0 %v2381
        %2503 = vmatpush1.bf16.msra.mxu0 %v2380
        %2504 = vmatprep.subr.bf16.mxu0 %v2379
        %2505 = vmatpush1.bf16.msra.mxu0 %v2378
        %2506 = vmatprep.subr.bf16.mxu0 %v2377
        %2507 = vmatpush1.bf16.msra.mxu0 %v2376
        %2508 = vmatprep.subr.bf16.mxu0 %v2375
        %2509 = vmatpush1.bf16.msra.mxu0 %v2374
        %2510 = vmatprep.subr.bf16.mxu0 %v2373
        %2511 = vmatpush1.bf16.msra.mxu0 %v2372
        %2512 = vmatprep.subr.bf16.mxu0 %v2371
        %2513 = vmatpush1.bf16.msra.mxu0 %v2370
        %2514 = vmatprep.subr.bf16.mxu0 %v2401
        %2515 = vmatpush2.bf16.msra.mxu0 %v2400
        %2516 = vmatprep.subr.bf16.mxu0 %v2399
        %2517 = vmatpush2.bf16.msra.mxu0 %v2398
        %2518 = vmatprep.subr.bf16.mxu0 %v2397
        %2519 = vmatpush2.bf16.msra.mxu0 %v2396
        %2520 = vmatprep.subr.bf16.mxu0 %v2395
        %2521 = vmatpush2.bf16.msra.mxu0 %v2394
        %2522 = vmatprep.subr.bf16.mxu0 %v2393
        %2523 = vmatpush2.bf16.msra.mxu0 %v2392
        %2524 = vmatprep.subr.bf16.mxu0 %v2391
        %2525 = vmatpush2.bf16.msra.mxu0 %v2390
        %2526 = vmatprep.subr.bf16.mxu0 %v2389
        %2527 = vmatpush2.bf16.msra.mxu0 %v2388
        %2528 = vmatprep.subr.bf16.mxu0 %v2387
        %2529 = vmatpush2.bf16.msra.mxu0 %v2386
        %2530 = vmatprep.mubr.bf16.mxu0 %v2147
        %2531 = vmatmul.mubr.bf16.gmra.mxu0 %v2146
        %v2532 = vpop.f32.mrf.mxu0
        %v2533 = vadd.f32 %v2091, %v2532
        %v2534 = vpop.f32.mrf.mxu0
        %v2535 = vadd.f32 %v2095, %v2534
        %v2536 = vpop.f32.mrf.mxu0
        %v2537 = vadd.f32 %v2091, %v2536
        %v2538 = vpop.f32.mrf.mxu0
        %v2539 = vadd.f32 %v2095, %v2538
        %2540 = vmatprep.mubr.bf16.mxu0 %v2151
        %2541 = vmatmul.mubr.bf16.gmra.mxu0 %v2150
        %v2542 = vpop.f32.mrf.mxu0
        %v2543 = vadd.f32 %v2091, %v2542
        %v2544 = vpop.f32.mrf.mxu0
        %v2545 = vadd.f32 %v2095, %v2544
        %v2546 = vpop.f32.mrf.mxu0
        %v2547 = vadd.f32 %v2091, %v2546
        %v2548 = vpop.f32.mrf.mxu0
        %v2549 = vadd.f32 %v2095, %v2548
        %2550 = vmatprep.mubr.bf16.mxu0 %v2155
        %2551 = vmatmul.mubr.bf16.gmra.mxu0 %v2154
        %v2552 = vpop.f32.mrf.mxu0
        %v2553 = vadd.f32 %v2091, %v2552
        %v2554 = vpop.f32.mrf.mxu0
        %v2555 = vadd.f32 %v2095, %v2554
        %v2556 = vpop.f32.mrf.mxu0
        %v2557 = vadd.f32 %v2091, %v2556
        %v2558 = vpop.f32.mrf.mxu0
        %v2559 = vadd.f32 %v2095, %v2558
        %2560 = vmatprep.mubr.bf16.mxu0 %v2159
        %2561 = vmatmul.mubr.bf16.gmra.mxu0 %v2158
        %v2562 = vpop.f32.mrf.mxu0
        %v2563 = vadd.f32 %v2091, %v2562
        %v2564 = vpop.f32.mrf.mxu0
        %v2565 = vadd.f32 %v2095, %v2564
        %v2566 = vpop.f32.mrf.mxu0
        %v2567 = vadd.f32 %v2091, %v2566
        %v2568 = vpop.f32.mrf.mxu0
        %v2569 = vadd.f32 %v2095, %v2568
        %2570 = vdwg.mxu0
        %2571 = vmatprep.subr.bf16.mxu0 %v2417
        %2572 = vmatpush1.bf16.msra.mxu0 %v2416
        %2573 = vmatprep.subr.bf16.mxu0 %v2415
        %2574 = vmatpush1.bf16.msra.mxu0 %v2414
        %2575 = vmatprep.subr.bf16.mxu0 %v2413
        %2576 = vmatpush1.bf16.msra.mxu0 %v2412
        %2577 = vmatprep.subr.bf16.mxu0 %v2411
        %2578 = vmatpush1.bf16.msra.mxu0 %v2410
        %2579 = vmatprep.subr.bf16.mxu0 %v2409
        %2580 = vmatpush1.bf16.msra.mxu0 %v2408
        %2581 = vmatprep.subr.bf16.mxu0 %v2407
        %2582 = vmatpush1.bf16.msra.mxu0 %v2406
        %2583 = vmatprep.subr.bf16.mxu0 %v2405
        %2584 = vmatpush1.bf16.msra.mxu0 %v2404
        %2585 = vmatprep.subr.bf16.mxu0 %v2403
        %2586 = vmatpush1.bf16.msra.mxu0 %v2402
        %2587 = vmatprep.subr.bf16.mxu0 %v2433
        %2588 = vmatpush2.bf16.msra.mxu0 %v2432
        %2589 = vmatprep.subr.bf16.mxu0 %v2431
        %2590 = vmatpush2.bf16.msra.mxu0 %v2430
        %2591 = vmatprep.subr.bf16.mxu0 %v2429
        %2592 = vmatpush2.bf16.msra.mxu0 %v2428
        %2593 = vmatprep.subr.bf16.mxu0 %v2427
        %2594 = vmatpush2.bf16.msra.mxu0 %v2426
        %2595 = vmatprep.subr.bf16.mxu0 %v2425
        %2596 = vmatpush2.bf16.msra.mxu0 %v2424
        %2597 = vmatprep.subr.bf16.mxu0 %v2423
        %2598 = vmatpush2.bf16.msra.mxu0 %v2422
        %2599 = vmatprep.subr.bf16.mxu0 %v2421
        %2600 = vmatpush2.bf16.msra.mxu0 %v2420
        %2601 = vmatprep.subr.bf16.mxu0 %v2419
        %2602 = vmatpush2.bf16.msra.mxu0 %v2418
        %2603 = vmatprep.mubr.bf16.mxu0 %v2149
        %2604 = vmatmul.mubr.bf16.gmra.mxu0 %v2148
        %v2605 = vpop.f32.mrf.mxu0
        %v2606 = vadd.f32 %v2533, %v2605
        %v2607 = vpop.f32.mrf.mxu0
        %v2608 = vadd.f32 %v2535, %v2607
        %v2609 = vpop.f32.mrf.mxu0
        %v2610 = vadd.f32 %v2537, %v2609
        %v2611 = vpop.f32.mrf.mxu0
        %v2612 = vadd.f32 %v2539, %v2611
        %2613 = vmatprep.mubr.bf16.mxu0 %v2153
        %2614 = vmatmul.mubr.bf16.gmra.mxu0 %v2152
        %v2615 = vpop.f32.mrf.mxu0
        %v2616 = vadd.f32 %v2543, %v2615
        %v2617 = vpop.f32.mrf.mxu0
        %v2618 = vadd.f32 %v2545, %v2617
        %v2619 = vpop.f32.mrf.mxu0
        %v2620 = vadd.f32 %v2547, %v2619
        %v2621 = vpop.f32.mrf.mxu0
        %v2622 = vadd.f32 %v2549, %v2621
        %2623 = vmatprep.mubr.bf16.mxu0 %v2157
        %2624 = vmatmul.mubr.bf16.gmra.mxu0 %v2156
        %v2625 = vpop.f32.mrf.mxu0
        %v2626 = vadd.f32 %v2553, %v2625
        %v2627 = vpop.f32.mrf.mxu0
        %v2628 = vadd.f32 %v2555, %v2627
        %v2629 = vpop.f32.mrf.mxu0
        %v2630 = vadd.f32 %v2557, %v2629
        %v2631 = vpop.f32.mrf.mxu0
        %v2632 = vadd.f32 %v2559, %v2631
        %2633 = vmatprep.mubr.bf16.mxu0 %v2161
        %2634 = vmatmul.mubr.bf16.gmra.mxu0 %v2160
        %v2635 = vpop.f32.mrf.mxu0
        %v2636 = vadd.f32 %v2563, %v2635
        %v2637 = vpop.f32.mrf.mxu0
        %v2638 = vadd.f32 %v2565, %v2637
        %v2639 = vpop.f32.mrf.mxu0
        %v2640 = vadd.f32 %v2567, %v2639
        %v2641 = vpop.f32.mrf.mxu0
        %v2642 = vadd.f32 %v2569, %v2641
        %2643 = vdwg.mxu0
        %v2644 = vpack.c.bf16 %v2610, %v2606
        %v2645 = vpack.c.bf16 %v2612, %v2608
        %v2646 = vpack.c.bf16 %v2620, %v2616
        %v2647 = vpack.c.bf16 %v2622, %v2618
        %v2648 = vpack.c.bf16 %v2630, %v2626
        %v2649 = vpack.c.bf16 %v2632, %v2628
        %v2650 = vpack.c.bf16 %v2640, %v2636
        %v2651 = vpack.c.bf16 %v2642, %v2638
        %v2660 = vunpack.c.l.b16 %v2644
        %v2661 = vunpack.c.l.b16 %v2645
        %v2662 = vunpack.c.h.b16 %v2644
        %v2663 = vunpack.c.h.b16 %v2645
        %v2664 = vunpack.c.l.b16 %v2646
        %v2665 = vunpack.c.l.b16 %v2647
        %v2666 = vunpack.c.h.b16 %v2646
        %v2667 = vunpack.c.h.b16 %v2647
        %v2668 = vunpack.c.l.b16 %v2648
        %v2669 = vunpack.c.l.b16 %v2649
        %v2670 = vunpack.c.h.b16 %v2648
        %v2671 = vunpack.c.h.b16 %v2649
        %v2672 = vunpack.c.l.b16 %v2650
        %v2673 = vunpack.c.l.b16 %v2651
        %v2674 = vunpack.c.h.b16 %v2650
        %v2675 = vunpack.c.h.b16 %v2651
        %v2676 = vpack.c.b16 %v2661, %v2660
        %v2677 = vpack.c.b16 %v2663, %v2662
        %v2678 = vpack.c.b16 %v2665, %v2664
        %v2679 = vpack.c.b16 %v2667, %v2666
        %v2680 = vpack.c.b16 %v2669, %v2668
        %v2681 = vpack.c.b16 %v2671, %v2670
        %v2682 = vpack.c.b16 %v2673, %v2672
        %v2683 = vpack.c.b16 %v2675, %v2674
        %2692 = vst [vmem:[%s458] sm:$0xff] %v2676
        %2693 = vst [vmem:[%s458 + $0x8] sm:$0xff] %v2677
        %2694 = vst [vmem:[%s458 + $0x10] sm:$0xff] %v2678
        %2695 = vst [vmem:[%s458 + $0x18] sm:$0xff] %v2679
        %2696 = vst [vmem:[%s458 + $0x20] sm:$0xff] %v2680
        %2697 = vst [vmem:[%s458 + $0x28] sm:$0xff] %v2681
        %2698 = vst [vmem:[%s458 + $0x30] sm:$0xff] %v2682
        %2699 = vst [vmem:[%s458 + $0x38] sm:$0xff] %v2683
        %s2700 = sand.u32 %s255, 1
        %s2701 = scalar_lea.sflag [#allocation5], %s2700
        %s2702 = sand.u32 %s255, 1
        %s2703 = smul.addr %s2702, 64
        %s2704 = scalar_lea.vmem [#allocation14], %s2703
        // Predicated region
        $region85: #{tpu_custom_call.1} parent=55 // pred_check
          %p2705 = pneg %p265
        $region86: #{tpu_custom_call.1} parent=55 // pred_check_branch
          %2707 = sbr.rel (%p2705) target = $region88
        $region87: #{tpu_custom_call.1} parent=55 // pred_region
          %s2708 = smul.u32 8, %s33
          %s2709 = smul.u32 2, %s34
          %s2711 = ssub.s32 1024, 1024
          %2712 = vsyncadd %s2701, %s2711
          %s2713 = smul.addr %s2708, 2
          %s2714 = sadd.s32 %s2709, %s2713
          %s2715 = smul.addr %s2714, 64
          %s2716 = scalar_lea.hbm %s9, %s2715
          %s2717 = sshll.u32 %s2704, 4
          %s2718 = int_to_ptr.vmem [resolvable:$true] %s2717
          %2723 = dma.vmem_to_hbm [thread:$0]  %s2718, 1024, %s2716, %s2701, 128, 128, 8
        $region88: #{tpu_custom_call.1} parent=55 // pred_fallthru
          _
      $region56: #{tpu_custom_call.1} parent=5 // pred_fallthru
        _
      %p2724 = scmp.le.s32.totalorder 2, %s24
      // Predicated region
      $region89: #{tpu_custom_call.1} parent=5 // pred_check
        %p2725 = pneg %p2724
      $region90: #{tpu_custom_call.1} parent=5 // pred_check_branch
        %2727 = sbr.rel (%p2725) target = $region92
      $region91: #{tpu_custom_call.1} parent=5 // pred_region
        %s2728 = ssub.s32 %s24, 2
        // Predicated region
        $region93: #{tpu_custom_call.1} parent=91 // pred_check
          %p2729 = pneg %p271
        $region94: #{tpu_custom_call.1} parent=91 // pred_check_branch
          %2731 = sbr.rel (%p2729) target = $region96
        $region95: #{tpu_custom_call.1} parent=91 // pred_region
          %s2732 = sand.u32 %s256, 1
          %s2733 = scalar_lea.sflag [#allocation5], %s2732
          %s2734 = sand.u32 %s256, 1
          %s2735 = smul.addr %s2734, 64
          %s2736 = scalar_lea.vmem [#allocation14], %s2735
          %2737 = dma.done %s2733, 1024
        $region96: #{tpu_custom_call.1} parent=91 // pred_fallthru
          _
      $region92: #{tpu_custom_call.1} parent=5 // pred_fallthru
        _
    $region6: #{tpu_custom_call.1} parent=1 // loop_footer
      %s28 = sadd.s32 1, %s24
    $region7: #{tpu_custom_call.1} parent=1 // loop_footer_branch
      %23 = sbr.rel target = $region3
    $region8: #{tpu_custom_call.1} parent=1 // loop_exit
      _
    %2738 = vsyncpa [#allocation4], 1
    %s2739 = scalar_lea.sflag [#allocation4], 1
    %2740 = vsyncpa %s2739, 1
    %2741 = vsyncpa [#allocation7], 1
    %2742 = vsyncpa [#allocation10], 1
    %2743 = vsyncpa [#allocation13], 1
    %2744 = vsyncpa [#allocation5], 1
    %s2745 = scalar_lea.sflag [#allocation5], 1
    %2746 = vsyncpa %s2745, 1

</llo_original>
